<compile_context>
chip_gen: v7x
topology: tpu7x:2x2x1
jax: 0.10.0
libtpu: 0.0.40
codegen_flags: <defaults>
</compile_context>

<pallas_src>
import functools
import math

import jax
import jax.numpy as jnp
from jax.experimental import pallas as pl
from jax.experimental.pallas import tpu as pltpu

LOG_SIG_MIN, LOG_SIG_MAX = -20.0, 2.0
HALF_LOG_2PI = 0.5 * math.log(2.0 * math.pi)


# ---------------------------------------------------------------------------
# Fused kernel
# ---------------------------------------------------------------------------
def _fused_kernel(
    # data
    ctx_ref, obs_ref, eps_z_ref, eps_a_ref,
    # packed context-encoder weights (all E experts in one matmul pair)
    enc_w1_ref, enc_b1_ref, enc_w2mu_ref, enc_b2mu_ref, enc_w2sg_ref, enc_b2sg_ref,
    # gate weights (scalar bias lives in SMEM)
    gate_wo_ref, gate_wz_bd_ref, gate_b_ref,
    # constant expand / group-sum matrices for the expert mixture
    rep_ref, gsum_ref,
    # policy weights (layer-1 split obs/z, heads packed mean|log_std)
    pol_w1o_ref, pol_w1z_ref, pol_b1_ref, pol_w2_ref, pol_b2_ref,
    pol_wh_ref, pol_bh_ref,
    # outputs
    z_out_ref, main_ref,
    *, latent_dim, num_experts, action_dim, inv_temperature):
  E, L, A = num_experts, latent_dim, action_dim
  t, n_ctx, d = ctx_ref.shape
  _, b, obs_dim = obs_ref.shape

  # ---- context encoder: E experts fused into one 128-lane matmul pair -----
  x = ctx_ref[...].reshape(t * n_ctx, d)                         # (t*n, d)
  h = jnp.maximum(
      jnp.dot(x, enc_w1_ref[...], preferred_element_type=jnp.float32)
      + enc_b1_ref[...], 0.0)                                    # (t*n, E*H)
  # separate mu / sigma matmuls (block-diagonal w2) avoid lane-unaligned splits
  mu = (jnp.dot(h, enc_w2mu_ref[...], preferred_element_type=jnp.float32)
        + enc_b2mu_ref[...])                                     # (t*n, E*L)
  sp = (jnp.dot(h, enc_w2sg_ref[...], preferred_element_type=jnp.float32)
        + enc_b2sg_ref[...])                                     # (t*n, E*L)
  sigma_sq = jnp.maximum(jax.nn.softplus(sp), 1e-7)              # clamp(min=1e-7)
  inv = (1.0 / sigma_sq).reshape(t, n_ctx, E * L)
  mu = mu.reshape(t, n_ctx, E * L)
  z_var = 1.0 / jnp.sum(inv, axis=1)                             # (t, E*L)  PoG
  z_mean = z_var * jnp.sum(mu * inv, axis=1)                     # (t, E*L)

  # ---- reparameterized per-expert z sample --------------------------------
  z_flat = z_mean + jnp.sqrt(z_var) * eps_z_ref[...]             # (t, E*L)
  z_out_ref[...] = z_flat

  # ---- soft gating over experts (experts_in_gates=True, hard=False) -------
  # TODO(synk): hard / gumbel_max straight-through one-hot gating not implemented.
  obs_flat = obs_ref[...].reshape(t * b, obs_dim)                # (t*b, D)
  lo = jnp.sum(obs_flat * gate_wo_ref[...], axis=-1,
               keepdims=True).reshape(t, b, 1)                   # (t, b, 1)
  lz = jnp.dot(z_flat, gate_wz_bd_ref[...],
               preferred_element_type=jnp.float32)               # (t, E)
  logits = (lo + lz[:, None, :] + gate_b_ref[0, 0]) * inv_temperature
  m = jnp.max(logits, axis=-1, keepdims=True)
  p = jnp.exp(logits - m)
  alpha = p / jnp.sum(p, axis=-1, keepdims=True)                 # (t, b, E)

  # ---- expert mixture: task_z[tb, :] = sum_e alpha[tb, e] * z[t, e, :] -----
  alpha_flat = alpha.reshape(t * b, E)
  alpha_rep = jnp.dot(alpha_flat, rep_ref[...],
                      preferred_element_type=jnp.float32)        # (t*b, E*L)
  prod = alpha_rep.reshape(t, b, E * L) * z_flat[:, None, :]     # (t, b, E*L)
  task_z = jnp.dot(prod.reshape(t * b, E * L), gsum_ref[...],
                   preferred_element_type=jnp.float32)           # (t*b, L)

  # ---- tanh-Gaussian policy (reparameterize=True, return_log_prob=True) ---
  # task_z enters the policy detached in torch; forward values are identical,
  # so no stop_gradient is needed in this forward-only kernel.
  h1 = jnp.maximum(
      jnp.dot(obs_flat, pol_w1o_ref[...], preferred_element_type=jnp.float32)
      + jnp.dot(task_z, pol_w1z_ref[...], preferred_element_type=jnp.float32)
      + pol_b1_ref[...], 0.0)
  h2 = jnp.maximum(
      jnp.dot(h1, pol_w2_ref[...], preferred_element_type=jnp.float32)
      + pol_b2_ref[...], 0.0)
  heads = (jnp.dot(h2, pol_wh_ref[...], preferred_element_type=jnp.float32)
           + pol_bh_ref[...])                                    # (t*b, 2A)
  mean = heads[:, :A]
  log_std = jnp.clip(heads[:, A:], LOG_SIG_MIN, LOG_SIG_MAX)
  std = jnp.exp(log_std)
  eps = eps_a_ref[...]
  pre_tanh = mean + std * eps
  action = jnp.tanh(pre_tanh)
  # ((pre_tanh - mean) / std)**2 == eps**2 by construction.
  logp = (-0.5 * eps * eps - log_std - HALF_LOG_2PI
          - jnp.log(1.0 - action * action + 1e-6))
  logp_sum = jnp.sum(logp, axis=-1, keepdims=True)               # (t*b, 1)

  # ---- single packed output buffer -----------------------------------------
  # TODO(synk): at >=128-lane widths build the packed tile with one
  #             jnp.concatenate and a single unmasked store.
  main_ref[:, 0:E] = alpha_flat
  main_ref[:, E:E + L] = task_z
  o = E + L
  main_ref[:, o:o + A] = action
  main_ref[:, o + A:o + 2 * A] = mean
  main_ref[:, o + 2 * A:o + 3 * A] = log_std
  main_ref[:, o + 3 * A:o + 4 * A] = pre_tanh
  main_ref[:, o + 4 * A:o + 4 * A + 1] = logp_sum


# ---------------------------------------------------------------------------
# One-time repacking of torch-layout weights into the fused-kernel layout
# ---------------------------------------------------------------------------
def pack_params(p, *, latent_dim, obs_dim):
  E, d, H = p["enc_w1"].shape
  L = latent_dim
  w2_mu, w2_sg = p["enc_w2"][:, :, :L], p["enc_w2"][:, :, L:]

  def block_diag(blocks):
    nb, r, c = blocks.shape
    out = jnp.zeros((nb * r, nb * c), dtype=blocks.dtype)
    for e in range(nb):
      out = out.at[e * r:(e + 1) * r, e * c:(e + 1) * c].set(blocks[e])
    return out

  gate_wz = p["gate_w"][:, obs_dim:]                             # (1, L)
  eye_e = jnp.eye(E, dtype=jnp.float32)
  return {
      # encoder: experts stacked along the lane axis, block-diagonal layer 2
      "enc_w1": jnp.transpose(p["enc_w1"], (1, 0, 2)).reshape(d, E * H),
      "enc_b1": p["enc_b1"].reshape(1, E * H),
      "enc_w2mu": block_diag(w2_mu),                             # (E*H, E*L)
      "enc_w2sg": block_diag(w2_sg),                             # (E*H, E*L)
      "enc_b2mu": p["enc_b2"][:, 0, :L].reshape(1, E * L),
      "enc_b2sg": p["enc_b2"][:, 0, L:].reshape(1, E * L),
      # gate
      "gate_wo": p["gate_w"][:, :obs_dim],                       # (1, D)
      "gate_wz_bd": jnp.kron(eye_e, gate_wz.reshape(L, 1)),      # (E*L, E)
      "gate_b": p["gate_b"],                                     # (1, 1) -> SMEM
      # constant expand / group-sum matrices for the mixture
      "rep": jnp.kron(eye_e, jnp.ones((1, L), jnp.float32)),     # (E, E*L)
      "gsum": jnp.kron(jnp.ones((E, 1), jnp.float32),
                       jnp.eye(L, dtype=jnp.float32)),           # (E*L, L)
      # policy: first layer split (no obs||z concat), heads packed
      "pol_w1o": p["pol_w1"][:obs_dim, :],
      "pol_w1z": p["pol_w1"][obs_dim:, :],
      "pol_b1": p["pol_b1"],
      "pol_w2": p["pol_w2"],
      "pol_b2": p["pol_b2"],
      "pol_wh": jnp.concatenate([p["pol_wm"], p["pol_ws"]], axis=1),
      "pol_bh": jnp.concatenate([p["pol_bm"], p["pol_bs"]], axis=1),
  }


# ---------------------------------------------------------------------------
# Full forward (MoE_PEARLAgent.forward)
# ---------------------------------------------------------------------------
def moe_pearl_forward(packed, obs, context, eps_z, eps_a, *,
                      latent_dim, num_experts, temperature):
  t, b, _ = obs.shape
  E, L = num_experts, latent_dim
  A = packed["pol_wh"].shape[1] // 2
  main_width = E + L + 4 * A + 1

  vmem = pl.BlockSpec(memory_space=pltpu.MemorySpace.VMEM)
  smem = pl.BlockSpec(memory_space=pltpu.MemorySpace.SMEM)

  kernel = functools.partial(
      _fused_kernel, latent_dim=L, num_experts=E, action_dim=A,
      inv_temperature=1.0 / float(temperature))

  z_flat, main = pl.pallas_call(
      kernel,
      out_shape=(jax.ShapeDtypeStruct((t, E * L), jnp.float32),
                 jax.ShapeDtypeStruct((t * b, main_width), jnp.float32)),
      in_specs=[vmem] * 12 + [smem] + [vmem] * 9,
      out_specs=(vmem, vmem),
  )(context, obs, eps_z.reshape(t, E * L), eps_a,
    packed["enc_w1"], packed["enc_b1"],
    packed["enc_w2mu"], packed["enc_b2mu"],
    packed["enc_w2sg"], packed["enc_b2sg"],
    packed["gate_wo"], packed["gate_wz_bd"], packed["gate_b"],
    packed["rep"], packed["gsum"],
    packed["pol_w1o"], packed["pol_w1z"], packed["pol_b1"],
    packed["pol_w2"], packed["pol_b2"],
    packed["pol_wh"], packed["pol_bh"])

  # Unpack the lane-dense output (cheap XLA slices on tiny arrays).
  alpha = main[:, :E].reshape(t, b, E)[..., None]                # (t, b, E, 1)
  task_z = main[:, E:E + L]                                      # (t*b, L)
  o = E + L
  action = main[:, o:o + A]
  mean = main[:, o + A:o + 2 * A]
  log_std = main[:, o + 2 * A:o + 3 * A]
  pre_tanh = main[:, o + 3 * A:o + 4 * A]
  log_prob = main[:, o + 4 * A:o + 4 * A + 1]

  # torch returns z_experts.unsqueeze(1).expand(-1, b, -1, -1) -- an expand VIEW.
  # Return the compact (t, E, L); callers can broadcast lazily if needed.
  z_experts = z_flat.reshape(t, E, L)
  policy_outputs = (action, mean, log_std, log_prob, pre_tanh)
  return policy_outputs, alpha, z_experts, task_z


# ---------------------------------------------------------------------------
# Pure-JAX reference (mirrors the PyTorch module) for correctness checking
# ---------------------------------------------------------------------------
def _reference_forward(p, obs, context, eps_z, eps_a, *, latent_dim, temperature):
  t, b, D = obs.shape
  E = p["enc_w1"].shape[0]
  L = latent_dim
  h = jax.nn.relu(jnp.einsum("tnd,edh->etnh", context, p["enc_w1"])
                  + p["enc_b1"][:, None, :, :])
  params = (jnp.einsum("etnh,ehk->etnk", h, p["enc_w2"])
            + p["enc_b2"][:, None, :, :])
  mu = params[..., :L]
  sig = jnp.maximum(jax.nn.softplus(params[..., L:]), 1e-7)
  inv = 1.0 / sig
  var = 1.0 / jnp.sum(inv, axis=2)                               # (E, t, L)
  mean = var * jnp.sum(mu * inv, axis=2)
  z_means = jnp.transpose(mean, (1, 0, 2))                       # (t, E, L)
  z_vars = jnp.transpose(var, (1, 0, 2))
  z_experts = z_means + jnp.sqrt(z_vars) * eps_z

  w = p["gate_w"][0]
  bg = p["gate_b"][0, 0]
  obs_u = jnp.broadcast_to(obs[:, :, None, :], (t, b, E, D))
  z_u = jnp.broadcast_to(z_experts[:, None, :, :], (t, b, E, L))
  xz = jnp.concatenate([obs_u, z_u], axis=-1)
  logits = (jnp.einsum("tbek,k->tbe", xz, w) + bg) / temperature
  alpha = jax.nn.softmax(logits, axis=-1)[..., None]             # (t, b, E, 1)
  expert_z = jnp.sum(alpha * z_u, axis=2)
  task_z = expert_z.reshape(t * b, L)

  in_ = jnp.concatenate([obs.reshape(t * b, D), task_z], axis=-1)
  h1 = jax.nn.relu(in_ @ p["pol_w1"] + p["pol_b1"])
  h2 = jax.nn.relu(h1 @ p["pol_w2"] + p["pol_b2"])
  mean_a = h2 @ p["pol_wm"] + p["pol_bm"]
  log_std = jnp.clip(h2 @ p["pol_ws"] + p["pol_bs"], LOG_SIG_MIN, LOG_SIG_MAX)
  std = jnp.exp(log_std)
  pre = mean_a + std * eps_a
  act = jnp.tanh(pre)
  logp = (-0.5 * ((pre - mean_a) / std) ** 2 - log_std - HALF_LOG_2PI
          - jnp.log(1.0 - act * act + 1e-6))
  logp = jnp.sum(logp, axis=-1, keepdims=True)
  return (act, mean_a, log_std, logp, pre), alpha, z_experts, task_z


if __name__ == "__main__":
  t, b = 2, 8
  obs_dim, action_dim = 16, 4
  latent_dim, num_experts = 8, 4
  n_ctx = 8
  ctx_dim = obs_dim + action_dim + 1            # use_next_obs_in_context=False
  H_enc, H_pol = 32, 32
  temperature = 1.0

  key = jax.random.PRNGKey(0)
  ks = jax.random.split(key, 16)

  def init(k, shape, scale=0.1):
    return scale * jax.random.normal(k, shape, dtype=jnp.float32)

  raw_params = {
      "enc_w1": init(ks[0], (num_experts, ctx_dim, H_enc)),
      "enc_b1": init(ks[1], (num_experts, 1, H_enc)),
      "enc_w2": init(ks[2], (num_experts, H_enc, 2 * latent_dim)),
      "enc_b2": init(ks[3], (num_experts, 1, 2 * latent_dim)),
      "gate_w": init(ks[4], (1, obs_dim + latent_dim)),
      "gate_b": init(ks[5], (1, 1)),
      "pol_w1": init(ks[6], (obs_dim + latent_dim, H_pol)),
      "pol_b1": init(ks[7], (1, H_pol)),
      "pol_w2": init(ks[8], (H_pol, H_pol)),
      "pol_b2": init(ks[9], (1, H_pol)),
      "pol_wm": init(ks[10], (H_pol, action_dim)),
      "pol_bm": init(ks[11], (1, action_dim)),
      "pol_ws": init(ks[12], (H_pol, action_dim)),
      "pol_bs": init(ks[13], (1, action_dim)),
  }

  obs = jax.random.normal(ks[14], (t, b, obs_dim), dtype=jnp.float32)
  kc, kz, ka = jax.random.split(ks[15], 3)
  context = jax.random.normal(kc, (t, n_ctx, ctx_dim), dtype=jnp.float32)
  eps_z = jax.random.normal(kz, (t, num_experts, latent_dim), dtype=jnp.float32)
  eps_a = jax.random.normal(ka, (t * b, action_dim), dtype=jnp.float32)

  packed = pack_params(raw_params, latent_dim=latent_dim, obs_dim=obs_dim)

  outs = moe_pearl_forward(packed, obs, context, eps_z, eps_a,
                           latent_dim=latent_dim, num_experts=num_experts,
                           temperature=temperature)
  jax.block_until_ready(outs)
  policy_outputs, alpha, z_experts, task_z = outs

  assert policy_outputs[0].shape == (t * b, action_dim)
  assert alpha.shape == (t, b, num_experts, 1)
  assert z_experts.shape == (t, num_experts, latent_dim)
  assert task_z.shape == (t * b, latent_dim)

  # Correctness vs. the unfused pure-JAX reference of the PyTorch module.
  ref = _reference_forward(raw_params, obs, context, eps_z, eps_a,
                           latent_dim=latent_dim, temperature=temperature)
  got = list(policy_outputs) + [alpha, z_experts, task_z]
  exp = list(ref[0]) + [ref[1], ref[2], ref[3]]
  for g, e in zip(got, exp):
    assert g.shape == e.shape, (g.shape, e.shape)
    assert jnp.allclose(g, e, rtol=1e-3, atol=1e-4), float(jnp.max(jnp.abs(g - e)))

  print("KERNEL_OK")
</pallas_src>

<mosaic_0001>
module attributes {stable_mosaic.version = 11 : i64} {
  func.func @_fused_kernel(%arg0: memref<2x8x21xf32, #tpu.memory_space<vmem>>, %arg1: memref<2x8x16xf32, #tpu.memory_space<vmem>>, %arg2: memref<2x32xf32, #tpu.memory_space<vmem>>, %arg3: memref<16x4xf32, #tpu.memory_space<vmem>>, %arg4: memref<21x128xf32, #tpu.memory_space<vmem>>, %arg5: memref<1x128xf32, #tpu.memory_space<vmem>>, %arg6: memref<128x32xf32, #tpu.memory_space<vmem>>, %arg7: memref<1x32xf32, #tpu.memory_space<vmem>>, %arg8: memref<128x32xf32, #tpu.memory_space<vmem>>, %arg9: memref<1x32xf32, #tpu.memory_space<vmem>>, %arg10: memref<1x16xf32, #tpu.memory_space<vmem>>, %arg11: memref<32x4xf32, #tpu.memory_space<vmem>>, %arg12: memref<1x1xf32, #tpu.memory_space<smem>>, %arg13: memref<4x32xf32, #tpu.memory_space<vmem>>, %arg14: memref<32x8xf32, #tpu.memory_space<vmem>>, %arg15: memref<16x32xf32, #tpu.memory_space<vmem>>, %arg16: memref<8x32xf32, #tpu.memory_space<vmem>>, %arg17: memref<1x32xf32, #tpu.memory_space<vmem>>, %arg18: memref<32x32xf32, #tpu.memory_space<vmem>>, %arg19: memref<1x32xf32, #tpu.memory_space<vmem>>, %arg20: memref<32x8xf32, #tpu.memory_space<vmem>>, %arg21: memref<1x8xf32, #tpu.memory_space<vmem>>, %arg22: memref<2x32xf32, #tpu.memory_space<vmem>>, %arg23: memref<16x29xf32, #tpu.memory_space<vmem>>) attributes {dimension_semantics = [], scalar_prefetch = 0 : i64, scratch_operands = 0 : i64, tpu.core_type = #tpu.core_type<tc>} {
    %c0 = arith.constant 0 : index
    %c0_0 = arith.constant 0 : index
    %c0_1 = arith.constant 0 : index
    %0 = vector.load %arg0[%c0, %c0_0, %c0_1] : memref<2x8x21xf32, #tpu.memory_space<vmem>>, vector<2x8x21xf32>
    %1 = vector.shape_cast %0 : vector<2x8x21xf32> to vector<16x21xf32>
    %c0_2 = arith.constant 0 : index
    %c0_3 = arith.constant 0 : index
    %2 = vector.load %arg4[%c0_2, %c0_3] : memref<21x128xf32, #tpu.memory_space<vmem>>, vector<21x128xf32>
    %cst = arith.constant dense<0.000000e+00> : vector<16x128xf32>
    %3 = tpu.matmul %1, %2, %cst {dimension_numbers = #tpu.dot_dimension_numbers<[1], [0], [0], [1], [0, 0, 1, 1], [], []>} : vector<16x21xf32>, vector<21x128xf32>, vector<16x128xf32> -> vector<16x128xf32>
    %c0_4 = arith.constant 0 : index
    %c0_5 = arith.constant 0 : index
    %4 = vector.load %arg5[%c0_4, %c0_5] : memref<1x128xf32, #tpu.memory_space<vmem>>, vector<1x128xf32>
    %5 = vector.broadcast %4 : vector<1x128xf32> to vector<16x128xf32>
    %6 = arith.addf %3, %5 : vector<16x128xf32>
    %cst_6 = arith.constant 0.000000e+00 : f32
    %7 = vector.broadcast %cst_6 : f32 to vector<16x128xf32>
    %8 = arith.maximumf %6, %7 : vector<16x128xf32>
    %c0_7 = arith.constant 0 : index
    %c0_8 = arith.constant 0 : index
    %9 = vector.load %arg6[%c0_7, %c0_8] : memref<128x32xf32, #tpu.memory_space<vmem>>, vector<128x32xf32>
    %cst_9 = arith.constant dense<0.000000e+00> : vector<16x32xf32>
    %10 = tpu.matmul %8, %9, %cst_9 {dimension_numbers = #tpu.dot_dimension_numbers<[1], [0], [0], [1], [0, 0, 1, 1], [], []>} : vector<16x128xf32>, vector<128x32xf32>, vector<16x32xf32> -> vector<16x32xf32>
    %c0_10 = arith.constant 0 : index
    %c0_11 = arith.constant 0 : index
    %11 = vector.load %arg7[%c0_10, %c0_11] : memref<1x32xf32, #tpu.memory_space<vmem>>, vector<1x32xf32>
    %12 = vector.broadcast %11 : vector<1x32xf32> to vector<16x32xf32>
    %13 = arith.addf %10, %12 : vector<16x32xf32>
    %c0_12 = arith.constant 0 : index
    %c0_13 = arith.constant 0 : index
    %14 = vector.load %arg8[%c0_12, %c0_13] : memref<128x32xf32, #tpu.memory_space<vmem>>, vector<128x32xf32>
    %cst_14 = arith.constant dense<0.000000e+00> : vector<16x32xf32>
    %15 = tpu.matmul %8, %14, %cst_14 {dimension_numbers = #tpu.dot_dimension_numbers<[1], [0], [0], [1], [0, 0, 1, 1], [], []>} : vector<16x128xf32>, vector<128x32xf32>, vector<16x32xf32> -> vector<16x32xf32>
    %c0_15 = arith.constant 0 : index
    %c0_16 = arith.constant 0 : index
    %16 = vector.load %arg9[%c0_15, %c0_16] : memref<1x32xf32, #tpu.memory_space<vmem>>, vector<1x32xf32>
    %17 = vector.broadcast %16 : vector<1x32xf32> to vector<16x32xf32>
    %18 = arith.addf %15, %17 : vector<16x32xf32>
    %cst_17 = arith.constant 0.000000e+00 : f32
    %19 = vector.broadcast %cst_17 : f32 to vector<16x32xf32>
    %20 = arith.maximumf %18, %19 : vector<16x32xf32>
    %21 = vector.broadcast %cst_17 : f32 to vector<16x32xf32>
    %22 = arith.subf %18, %21 : vector<16x32xf32>
    %23 = arith.cmpf one, %22, %22 : vector<16x32xf32>
    %24 = vector.broadcast %cst_17 : f32 to vector<16x32xf32>
    %25 = arith.addf %18, %24 : vector<16x32xf32>
    %26 = math.absf %22 : vector<16x32xf32>
    %cst_18 = arith.constant 0.000000e+00 : f32
    %27 = vector.broadcast %cst_18 : f32 to vector<16x32xf32>
    %28 = arith.subf %27, %26 : vector<16x32xf32>
    %29 = math.exp %28 : vector<16x32xf32>
    %30 = math.log1p %29 : vector<16x32xf32>
    %31 = arith.addf %20, %30 : vector<16x32xf32>
    %32 = arith.select %23, %25, %31 : vector<16x32xi1>, vector<16x32xf32>
    %cst_19 = arith.constant 1.000000e-07 : f32
    %33 = vector.broadcast %cst_19 : f32 to vector<16x32xf32>
    %34 = arith.maximumf %32, %33 : vector<16x32xf32>
    %cst_20 = arith.constant 1.000000e+00 : f32
    %35 = vector.broadcast %cst_20 : f32 to vector<16x32xf32>
    %36 = arith.divf %35, %34 : vector<16x32xf32>
    %37 = vector.shape_cast %36 : vector<16x32xf32> to vector<2x8x32xf32>
    %38 = vector.shape_cast %13 : vector<16x32xf32> to vector<2x8x32xf32>
    %cst_21 = arith.constant dense<0.000000e+00> : vector<2x32xf32>
    %39 = vector.multi_reduction <add>, %37, %cst_21 [1] : vector<2x8x32xf32> to vector<2x32xf32>
    %cst_22 = arith.constant 1.000000e+00 : f32
    %40 = vector.broadcast %cst_22 : f32 to vector<2x32xf32>
    %41 = arith.divf %40, %39 : vector<2x32xf32>
    %42 = arith.mulf %38, %37 : vector<2x8x32xf32>
    %cst_23 = arith.constant dense<0.000000e+00> : vector<2x32xf32>
    %43 = vector.multi_reduction <add>, %42, %cst_23 [1] : vector<2x8x32xf32> to vector<2x32xf32>
    %44 = arith.mulf %41, %43 : vector<2x32xf32>
    %45 = math.sqrt %41 : vector<2x32xf32>
    %c0_24 = arith.constant 0 : index
    %c0_25 = arith.constant 0 : index
    %46 = vector.load %arg2[%c0_24, %c0_25] : memref<2x32xf32, #tpu.memory_space<vmem>>, vector<2x32xf32>
    %47 = arith.mulf %45, %46 : vector<2x32xf32>
    %48 = arith.addf %44, %47 : vector<2x32xf32>
    %c0_26 = arith.constant 0 : index
    %c0_27 = arith.constant 0 : index
    %49 = vector.load %arg22[%c0_26, %c0_27] : memref<2x32xf32, #tpu.memory_space<vmem>>, vector<2x32xf32>
    tpu.vector_store %arg22[%c0_26, %c0_27], %48 {strides = array<i32>} : memref<2x32xf32, #tpu.memory_space<vmem>>, vector<2x32xf32>,
    %c0_28 = arith.constant 0 : index
    %c0_29 = arith.constant 0 : index
    %c0_30 = arith.constant 0 : index
    %50 = vector.load %arg1[%c0_28, %c0_29, %c0_30] : memref<2x8x16xf32, #tpu.memory_space<vmem>>, vector<2x8x16xf32>
    %51 = vector.shape_cast %50 : vector<2x8x16xf32> to vector<16x16xf32>
    %c0_31 = arith.constant 0 : index
    %c0_32 = arith.constant 0 : index
    %52 = vector.load %arg10[%c0_31, %c0_32] : memref<1x16xf32, #tpu.memory_space<vmem>>, vector<1x16xf32>
    %53 = vector.broadcast %52 : vector<1x16xf32> to vector<16x16xf32>
    %54 = arith.mulf %51, %53 : vector<16x16xf32>
    %cst_33 = arith.constant dense<0.000000e+00> : vector<16xf32>
    %55 = vector.multi_reduction <add>, %54, %cst_33 [1] : vector<16x16xf32> to vector<16xf32>
    %56 = vector.shape_cast %55 : vector<16xf32> to vector<16x1xf32>
    %57 = vector.shape_cast %56 : vector<16x1xf32> to vector<2x8x1xf32>
    %c0_34 = arith.constant 0 : index
    %c0_35 = arith.constant 0 : index
    %58 = vector.load %arg11[%c0_34, %c0_35] : memref<32x4xf32, #tpu.memory_space<vmem>>, vector<32x4xf32>
    %cst_36 = arith.constant dense<0.000000e+00> : vector<2x4xf32>
    %59 = tpu.matmul %48, %58, %cst_36 {dimension_numbers = #tpu.dot_dimension_numbers<[1], [0], [0], [1], [0, 0, 1, 1], [], []>} : vector<2x32xf32>, vector<32x4xf32>, vector<2x4xf32> -> vector<2x4xf32>
    %60 = vector.shape_cast %59 : vector<2x4xf32> to vector<2x1x4xf32>
    %61 = vector.broadcast %57 : vector<2x8x1xf32> to vector<2x8x4xf32>
    %62 = vector.broadcast %60 : vector<2x1x4xf32> to vector<2x8x4xf32>
    %63 = arith.addf %61, %62 : vector<2x8x4xf32>
    %c0_37 = arith.constant 0 : index
    %c0_38 = arith.constant 0 : index
    %64 = memref.load %arg12[%c0_37, %c0_38] : memref<1x1xf32, #tpu.memory_space<smem>>
    %65 = vector.broadcast %64 : f32 to vector<2x8x4xf32>
    %66 = arith.addf %63, %65 : vector<2x8x4xf32>
    %cst_39 = arith.constant 1.000000e+00 : f32
    %67 = vector.broadcast %cst_39 : f32 to vector<2x8x4xf32>
    %68 = arith.mulf %66, %67 : vector<2x8x4xf32>
    %cst_40 = arith.constant dense<0xFF800000> : vector<2x8xf32>
    %69 = vector.multi_reduction <maximumf>, %68, %cst_40 [2] : vector<2x8x4xf32> to vector<2x8xf32>
    %70 = vector.shape_cast %69 : vector<2x8xf32> to vector<2x8x1xf32>
    %71 = vector.broadcast %70 : vector<2x8x1xf32> to vector<2x8x4xf32>
    %72 = arith.subf %68, %71 : vector<2x8x4xf32>
    %73 = math.exp %72 : vector<2x8x4xf32>
    %cst_41 = arith.constant dense<0.000000e+00> : vector<2x8xf32>
    %74 = vector.multi_reduction <add>, %73, %cst_41 [2] : vector<2x8x4xf32> to vector<2x8xf32>
    %75 = vector.shape_cast %74 : vector<2x8xf32> to vector<2x8x1xf32>
    %76 = vector.broadcast %75 : vector<2x8x1xf32> to vector<2x8x4xf32>
    %77 = arith.divf %73, %76 : vector<2x8x4xf32>
    %78 = vector.shape_cast %77 : vector<2x8x4xf32> to vector<16x4xf32>
    %c0_42 = arith.constant 0 : index
    %c0_43 = arith.constant 0 : index
    %79 = vector.load %arg13[%c0_42, %c0_43] : memref<4x32xf32, #tpu.memory_space<vmem>>, vector<4x32xf32>
    %cst_44 = arith.constant dense<0.000000e+00> : vector<16x32xf32>
    %80 = tpu.matmul %78, %79, %cst_44 {dimension_numbers = #tpu.dot_dimension_numbers<[1], [0], [0], [1], [0, 0, 1, 1], [], []>} : vector<16x4xf32>, vector<4x32xf32>, vector<16x32xf32> -> vector<16x32xf32>
    %81 = vector.shape_cast %80 : vector<16x32xf32> to vector<2x8x32xf32>
    %82 = vector.shape_cast %48 : vector<2x32xf32> to vector<2x1x32xf32>
    %83 = vector.broadcast %82 : vector<2x1x32xf32> to vector<2x8x32xf32>
    %84 = arith.mulf %81, %83 : vector<2x8x32xf32>
    %85 = vector.shape_cast %84 : vector<2x8x32xf32> to vector<16x32xf32>
    %c0_45 = arith.constant 0 : index
    %c0_46 = arith.constant 0 : index
    %86 = vector.load %arg14[%c0_45, %c0_46] : memref<32x8xf32, #tpu.memory_space<vmem>>, vector<32x8xf32>
    %cst_47 = arith.constant dense<0.000000e+00> : vector<16x8xf32>
    %87 = tpu.matmul %85, %86, %cst_47 {dimension_numbers = #tpu.dot_dimension_numbers<[1], [0], [0], [1], [0, 0, 1, 1], [], []>} : vector<16x32xf32>, vector<32x8xf32>, vector<16x8xf32> -> vector<16x8xf32>
    %c0_48 = arith.constant 0 : index
    %c0_49 = arith.constant 0 : index
    %88 = vector.load %arg15[%c0_48, %c0_49] : memref<16x32xf32, #tpu.memory_space<vmem>>, vector<16x32xf32>
    %cst_50 = arith.constant dense<0.000000e+00> : vector<16x32xf32>
    %89 = tpu.matmul %51, %88, %cst_50 {dimension_numbers = #tpu.dot_dimension_numbers<[1], [0], [0], [1], [0, 0, 1, 1], [], []>} : vector<16x16xf32>, vector<16x32xf32>, vector<16x32xf32> -> vector<16x32xf32>
    %c0_51 = arith.constant 0 : index
    %c0_52 = arith.constant 0 : index
    %90 = vector.load %arg16[%c0_51, %c0_52] : memref<8x32xf32, #tpu.memory_space<vmem>>, vector<8x32xf32>
    %cst_53 = arith.constant dense<0.000000e+00> : vector<16x32xf32>
    %91 = tpu.matmul %87, %90, %cst_53 {dimension_numbers = #tpu.dot_dimension_numbers<[1], [0], [0], [1], [0, 0, 1, 1], [], []>} : vector<16x8xf32>, vector<8x32xf32>, vector<16x32xf32> -> vector<16x32xf32>
    %92 = arith.addf %89, %91 : vector<16x32xf32>
    %c0_54 = arith.constant 0 : index
    %c0_55 = arith.constant 0 : index
    %93 = vector.load %arg17[%c0_54, %c0_55] : memref<1x32xf32, #tpu.memory_space<vmem>>, vector<1x32xf32>
    %94 = vector.broadcast %93 : vector<1x32xf32> to vector<16x32xf32>
    %95 = arith.addf %92, %94 : vector<16x32xf32>
    %cst_56 = arith.constant 0.000000e+00 : f32
    %96 = vector.broadcast %cst_56 : f32 to vector<16x32xf32>
    %97 = arith.maximumf %95, %96 : vector<16x32xf32>
    %c0_57 = arith.constant 0 : index
    %c0_58 = arith.constant 0 : index
    %98 = vector.load %arg18[%c0_57, %c0_58] : memref<32x32xf32, #tpu.memory_space<vmem>>, vector<32x32xf32>
    %cst_59 = arith.constant dense<0.000000e+00> : vector<16x32xf32>
    %99 = tpu.matmul %97, %98, %cst_59 {dimension_numbers = #tpu.dot_dimension_numbers<[1], [0], [0], [1], [0, 0, 1, 1], [], []>} : vector<16x32xf32>, vector<32x32xf32>, vector<16x32xf32> -> vector<16x32xf32>
    %c0_60 = arith.constant 0 : index
    %c0_61 = arith.constant 0 : index
    %100 = vector.load %arg19[%c0_60, %c0_61] : memref<1x32xf32, #tpu.memory_space<vmem>>, vector<1x32xf32>
    %101 = vector.broadcast %100 : vector<1x32xf32> to vector<16x32xf32>
    %102 = arith.addf %99, %101 : vector<16x32xf32>
    %cst_62 = arith.constant 0.000000e+00 : f32
    %103 = vector.broadcast %cst_62 : f32 to vector<16x32xf32>
    %104 = arith.maximumf %102, %103 : vector<16x32xf32>
    %c0_63 = arith.constant 0 : index
    %c0_64 = arith.constant 0 : index
    %105 = vector.load %arg20[%c0_63, %c0_64] : memref<32x8xf32, #tpu.memory_space<vmem>>, vector<32x8xf32>
    %cst_65 = arith.constant dense<0.000000e+00> : vector<16x8xf32>
    %106 = tpu.matmul %104, %105, %cst_65 {dimension_numbers = #tpu.dot_dimension_numbers<[1], [0], [0], [1], [0, 0, 1, 1], [], []>} : vector<16x32xf32>, vector<32x8xf32>, vector<16x8xf32> -> vector<16x8xf32>
    %c0_66 = arith.constant 0 : index
    %c0_67 = arith.constant 0 : index
    %107 = vector.load %arg21[%c0_66, %c0_67] : memref<1x8xf32, #tpu.memory_space<vmem>>, vector<1x8xf32>
    %108 = vector.broadcast %107 : vector<1x8xf32> to vector<16x8xf32>
    %109 = arith.addf %106, %108 : vector<16x8xf32>
    %110 = vector.extract_strided_slice %109 {offsets = [0, 0], sizes = [16, 4], strides = [1, 1]} : vector<16x8xf32> to vector<16x4xf32>
    %111 = vector.extract_strided_slice %109 {offsets = [0, 4], sizes = [16, 4], strides = [1, 1]} : vector<16x8xf32> to vector<16x4xf32>
    %cst_68 = arith.constant -2.000000e+01 : f32
    %cst_69 = arith.constant 2.000000e+00 : f32
    %112 = vector.broadcast %cst_68 : f32 to vector<16x4xf32>
    %113 = arith.maximumf %112, %111 : vector<16x4xf32>
    %114 = vector.broadcast %cst_69 : f32 to vector<16x4xf32>
    %115 = arith.minimumf %114, %113 : vector<16x4xf32>
    %116 = math.exp %115 : vector<16x4xf32>
    %c0_70 = arith.constant 0 : index
    %c0_71 = arith.constant 0 : index
    %117 = vector.load %arg3[%c0_70, %c0_71] : memref<16x4xf32, #tpu.memory_space<vmem>>, vector<16x4xf32>
    %118 = arith.mulf %116, %117 : vector<16x4xf32>
    %119 = arith.addf %110, %118 : vector<16x4xf32>
    %120 = math.tanh %119 : vector<16x4xf32>
    %cst_72 = arith.constant -5.000000e-01 : f32
    %121 = vector.broadcast %cst_72 : f32 to vector<16x4xf32>
    %122 = arith.mulf %121, %117 : vector<16x4xf32>
    %123 = arith.mulf %122, %117 : vector<16x4xf32>
    %124 = arith.subf %123, %115 : vector<16x4xf32>
    %cst_73 = arith.constant 0.918938517 : f32
    %125 = vector.broadcast %cst_73 : f32 to vector<16x4xf32>
    %126 = arith.subf %124, %125 : vector<16x4xf32>
    %127 = arith.mulf %120, %120 : vector<16x4xf32>
    %cst_74 = arith.constant 1.000000e+00 : f32
    %128 = vector.broadcast %cst_74 : f32 to vector<16x4xf32>
    %129 = arith.subf %128, %127 : vector<16x4xf32>
    %cst_75 = arith.constant 9.99999997E-7 : f32
    %130 = vector.broadcast %cst_75 : f32 to vector<16x4xf32>
    %131 = arith.addf %129, %130 : vector<16x4xf32>
    %132 = math.log %131 : vector<16x4xf32>
    %133 = arith.subf %126, %132 : vector<16x4xf32>
    %cst_76 = arith.constant dense<0.000000e+00> : vector<16xf32>
    %134 = vector.multi_reduction <add>, %133, %cst_76 [1] : vector<16x4xf32> to vector<16xf32>
    %135 = vector.shape_cast %134 : vector<16xf32> to vector<16x1xf32>
    %c0_77 = arith.constant 0 : index
    %c0_78 = arith.constant 0 : index
    %136 = vector.load %arg23[%c0_77, %c0_78] : memref<16x29xf32, #tpu.memory_space<vmem>>, vector<16x4xf32>
    tpu.vector_store %arg23[%c0_77, %c0_78], %78 {strides = array<i32>} : memref<16x29xf32, #tpu.memory_space<vmem>>, vector<16x4xf32>,
    %c0_79 = arith.constant 0 : index
    %c4 = arith.constant 4 : index
    %137 = vector.load %arg23[%c0_79, %c4] : memref<16x29xf32, #tpu.memory_space<vmem>>, vector<16x8xf32>
    tpu.vector_store %arg23[%c0_79, %c4], %87 {strides = array<i32>} : memref<16x29xf32, #tpu.memory_space<vmem>>, vector<16x8xf32>,
    %c0_80 = arith.constant 0 : index
    %c12 = arith.constant 12 : index
    %138 = vector.load %arg23[%c0_80, %c12] : memref<16x29xf32, #tpu.memory_space<vmem>>, vector<16x4xf32>
    tpu.vector_store %arg23[%c0_80, %c12], %120 {strides = array<i32>} : memref<16x29xf32, #tpu.memory_space<vmem>>, vector<16x4xf32>,
    %c0_81 = arith.constant 0 : index
    %c16 = arith.constant 16 : index
    %139 = vector.load %arg23[%c0_81, %c16] : memref<16x29xf32, #tpu.memory_space<vmem>>, vector<16x4xf32>
    tpu.vector_store %arg23[%c0_81, %c16], %110 {strides = array<i32>} : memref<16x29xf32, #tpu.memory_space<vmem>>, vector<16x4xf32>,
    %c0_82 = arith.constant 0 : index
    %c20 = arith.constant 20 : index
    %140 = vector.load %arg23[%c0_82, %c20] : memref<16x29xf32, #tpu.memory_space<vmem>>, vector<16x4xf32>
    tpu.vector_store %arg23[%c0_82, %c20], %115 {strides = array<i32>} : memref<16x29xf32, #tpu.memory_space<vmem>>, vector<16x4xf32>,
    %c0_83 = arith.constant 0 : index
    %c24 = arith.constant 24 : index
    %141 = vector.load %arg23[%c0_83, %c24] : memref<16x29xf32, #tpu.memory_space<vmem>>, vector<16x4xf32>
    tpu.vector_store %arg23[%c0_83, %c24], %119 {strides = array<i32>} : memref<16x29xf32, #tpu.memory_space<vmem>>, vector<16x4xf32>,
    %c0_84 = arith.constant 0 : index
    %c28 = arith.constant 28 : index
    %142 = vector.load %arg23[%c0_84, %c28] : memref<16x29xf32, #tpu.memory_space<vmem>>, vector<16x1xf32>
    tpu.vector_store %arg23[%c0_84, %c28], %135 {strides = array<i32>} : memref<16x29xf32, #tpu.memory_space<vmem>>, vector<16x1xf32>,
    return
  }
}

</mosaic_0001>

<llo_original>
// kernel: tpu_custom_call.1
$region0: #{tpu_custom_call.1}
  #allocation0 [shape = 'u32[]', space=smem, size = 0x4, offset = 0x4, fixed_abs, tag = 'smem constant byte address 0x4 - core index']
  #allocation1 [shape = 'u32[144,128]{1,0:T(1,128)}', space=vmem, size = 0x12000, scoped, tag = 'internal scratch']
  #allocation2 [shape = 'f32[1,1]{1,0:T(1,128)S(6)}', space=smem, size = 0x200, scoped, tag = 'scoped memory for tpu_custom_call.1']
  %s0 = inlined_call_operand.vmem [shape: f32[2,8,21], index: 0, kind: input, shape index: {}]
  %s1 = inlined_call_operand.vmem [shape: f32[2,8,16], index: 1, kind: input, shape index: {}]
  %s2 = inlined_call_operand.vmem [shape: f32[2,32], index: 2, kind: input, shape index: {}]
  %s3 = inlined_call_operand.vmem [shape: f32[16,4], index: 3, kind: input, shape index: {}]
  %s4 = inlined_call_operand.vmem [shape: f32[21,128], index: 4, kind: input, shape index: {}]
  %s5 = inlined_call_operand.vmem [shape: f32[1,128], index: 5, kind: input, shape index: {}]
  %s6 = inlined_call_operand.vmem [shape: f32[128,32], index: 6, kind: input, shape index: {}]
  %s7 = inlined_call_operand.vmem [shape: f32[1,32], index: 7, kind: input, shape index: {}]
  %s8 = inlined_call_operand.vmem [shape: f32[128,32], index: 8, kind: input, shape index: {}]
  %s9 = inlined_call_operand.vmem [shape: f32[1,32], index: 9, kind: input, shape index: {}]
  %s10 = inlined_call_operand.vmem [shape: f32[1,16], index: 10, kind: input, shape index: {}]
  %s11 = inlined_call_operand.vmem [shape: f32[32,4], index: 11, kind: input, shape index: {}]
  %s12 = inlined_call_operand.<no memory space> [shape: f32[1,1], index: 12, kind: input, shape index: {}]
  %s13 = inlined_call_operand.vmem [shape: f32[4,32], index: 13, kind: input, shape index: {}]
  %s14 = inlined_call_operand.vmem [shape: f32[32,8], index: 14, kind: input, shape index: {}]
  %s15 = inlined_call_operand.vmem [shape: f32[16,32], index: 15, kind: input, shape index: {}]
  %s16 = inlined_call_operand.vmem [shape: f32[8,32], index: 16, kind: input, shape index: {}]
  %s17 = inlined_call_operand.vmem [shape: f32[1,32], index: 17, kind: input, shape index: {}]
  %s18 = inlined_call_operand.vmem [shape: f32[32,32], index: 18, kind: input, shape index: {}]
  %s19 = inlined_call_operand.vmem [shape: f32[1,32], index: 19, kind: input, shape index: {}]
  %s20 = inlined_call_operand.vmem [shape: f32[32,8], index: 20, kind: input, shape index: {}]
  %s21 = inlined_call_operand.vmem [shape: f32[1,8], index: 21, kind: input, shape index: {}]
  %s22 = inlined_call_operand.hbm [shape: f32[2,32], index: 22, kind: output, shape index: {0}]
  %s23 = inlined_call_operand.hbm [shape: f32[16,29], index: 23, kind: output, shape index: {1}]
  %24 = xla_tuple %s22, %s23
  %s25 = sld [smem:[#allocation0]]
  $region106: #{tpu_custom_call.1} parent=0
    _
  %s27 = ssub.s32 1, %s25
  %s28 = scalar_select 0, %s27, %s25
  %29 = sst [smem:[#allocation2]] %s12
  $region1: #{tpu_custom_call.1} parent=0
    #allocation3 [shape = 'u8[1024]{0}', space=vmem, size = 0x400, scoped, tag = 'output window, operand 0, single buffered']
    #allocation4 [shape = 's32[1]{0}', space=sflag, size = 0x4, scoped, tag = 'scoped memory for tpu_custom_call.1']
    #allocation5 [shape = 'u8[8192]{0}', space=vmem, size = 0x2000, scoped, tag = 'output window, operand 1, single buffered']
    #allocation6 [shape = 's32[1]{0}', space=sflag, size = 0x4, scoped, tag = 'scoped memory for tpu_custom_call.1']
    %30 = vsyncpa [#allocation4], 0
    %31 = vsyncpa [#allocation6], 0
    // Predicated region
    $region2: #{tpu_custom_call.1} parent=1 // pred_check
      _
    $region3: #{tpu_custom_call.1} parent=1 // pred_check_branch
      %33 = sbr.rel (0) target = $region5
    $region4: #{tpu_custom_call.1} parent=1 // pred_region
      _
    $region5: #{tpu_custom_call.1} parent=1 // pred_fallthru
      _
    // Predicated region
    $region6: #{tpu_custom_call.1} parent=1 // pred_check
      _
    $region7: #{tpu_custom_call.1} parent=1 // pred_check_branch
      %35 = sbr.rel (0) target = $region9
    $region8: #{tpu_custom_call.1} parent=1 // pred_region
      _
    $region9: #{tpu_custom_call.1} parent=1 // pred_fallthru
      _
    // Predicated region
    $region10: #{tpu_custom_call.1} parent=1 // pred_check
      _
    $region11: #{tpu_custom_call.1} parent=1 // pred_check_branch
      %37 = sbr.rel (0) target = $region13
    $region12: #{tpu_custom_call.1} parent=1 // pred_region
      _
    $region13: #{tpu_custom_call.1} parent=1 // pred_fallthru
      _
    // Predicated region
    $region14: #{tpu_custom_call.1} parent=1 // pred_check
      _
    $region15: #{tpu_custom_call.1} parent=1 // pred_check_branch
      %39 = sbr.rel (0) target = $region17
    $region16: #{tpu_custom_call.1} parent=1 // pred_region
      _
    $region17: #{tpu_custom_call.1} parent=1 // pred_fallthru
      _
    // Predicated region
    $region18: #{tpu_custom_call.1} parent=1 // pred_check
      _
    $region19: #{tpu_custom_call.1} parent=1 // pred_check_branch
      %41 = sbr.rel (0) target = $region21
    $region20: #{tpu_custom_call.1} parent=1 // pred_region
      _
    $region21: #{tpu_custom_call.1} parent=1 // pred_fallthru
      _
    // Predicated region
    $region22: #{tpu_custom_call.1} parent=1 // pred_check
      _
    $region23: #{tpu_custom_call.1} parent=1 // pred_check_branch
      %43 = sbr.rel (0) target = $region25
    $region24: #{tpu_custom_call.1} parent=1 // pred_region
      _
    $region25: #{tpu_custom_call.1} parent=1 // pred_fallthru
      _
    // Predicated region
    $region26: #{tpu_custom_call.1} parent=1 // pred_check
      _
    $region27: #{tpu_custom_call.1} parent=1 // pred_check_branch
      %45 = sbr.rel (0) target = $region29
    $region28: #{tpu_custom_call.1} parent=1 // pred_region
      _
    $region29: #{tpu_custom_call.1} parent=1 // pred_fallthru
      _
    // Predicated region
    $region30: #{tpu_custom_call.1} parent=1 // pred_check
      _
    $region31: #{tpu_custom_call.1} parent=1 // pred_check_branch
      %47 = sbr.rel (0) target = $region33
    $region32: #{tpu_custom_call.1} parent=1 // pred_region
      _
    $region33: #{tpu_custom_call.1} parent=1 // pred_fallthru
      _
    // Predicated region
    $region34: #{tpu_custom_call.1} parent=1 // pred_check
      _
    $region35: #{tpu_custom_call.1} parent=1 // pred_check_branch
      %49 = sbr.rel (0) target = $region37
    $region36: #{tpu_custom_call.1} parent=1 // pred_region
      _
    $region37: #{tpu_custom_call.1} parent=1 // pred_fallthru
      _
    // Predicated region
    $region38: #{tpu_custom_call.1} parent=1 // pred_check
      _
    $region39: #{tpu_custom_call.1} parent=1 // pred_check_branch
      %51 = sbr.rel (0) target = $region41
    $region40: #{tpu_custom_call.1} parent=1 // pred_region
      _
    $region41: #{tpu_custom_call.1} parent=1 // pred_fallthru
      _
    // Predicated region
    $region42: #{tpu_custom_call.1} parent=1 // pred_check
      _
    $region43: #{tpu_custom_call.1} parent=1 // pred_check_branch
      %53 = sbr.rel (0) target = $region45
    $region44: #{tpu_custom_call.1} parent=1 // pred_region
      _
    $region45: #{tpu_custom_call.1} parent=1 // pred_fallthru
      _
    // Predicated region
    $region46: #{tpu_custom_call.1} parent=1 // pred_check
      _
    $region47: #{tpu_custom_call.1} parent=1 // pred_check_branch
      %55 = sbr.rel (0) target = $region49
    $region48: #{tpu_custom_call.1} parent=1 // pred_region
      _
    $region49: #{tpu_custom_call.1} parent=1 // pred_fallthru
      _
    // Predicated region
    $region50: #{tpu_custom_call.1} parent=1 // pred_check
      _
    $region51: #{tpu_custom_call.1} parent=1 // pred_check_branch
      %57 = sbr.rel (0) target = $region53
    $region52: #{tpu_custom_call.1} parent=1 // pred_region
      _
    $region53: #{tpu_custom_call.1} parent=1 // pred_fallthru
      _
    // Predicated region
    $region54: #{tpu_custom_call.1} parent=1 // pred_check
      _
    $region55: #{tpu_custom_call.1} parent=1 // pred_check_branch
      %59 = sbr.rel (0) target = $region57
    $region56: #{tpu_custom_call.1} parent=1 // pred_region
      _
    $region57: #{tpu_custom_call.1} parent=1 // pred_fallthru
      _
    // Predicated region
    $region58: #{tpu_custom_call.1} parent=1 // pred_check
      _
    $region59: #{tpu_custom_call.1} parent=1 // pred_check_branch
      %61 = sbr.rel (0) target = $region61
    $region60: #{tpu_custom_call.1} parent=1 // pred_region
      _
    $region61: #{tpu_custom_call.1} parent=1 // pred_fallthru
      _
    // Predicated region
    $region62: #{tpu_custom_call.1} parent=1 // pred_check
      _
    $region63: #{tpu_custom_call.1} parent=1 // pred_check_branch
      %63 = sbr.rel (0) target = $region65
    $region64: #{tpu_custom_call.1} parent=1 // pred_region
      _
    $region65: #{tpu_custom_call.1} parent=1 // pred_fallthru
      _
    // Predicated region
    $region66: #{tpu_custom_call.1} parent=1 // pred_check
      _
    $region67: #{tpu_custom_call.1} parent=1 // pred_check_branch
      %65 = sbr.rel (0) target = $region69
    $region68: #{tpu_custom_call.1} parent=1 // pred_region
      _
    $region69: #{tpu_custom_call.1} parent=1 // pred_fallthru
      _
    // Predicated region
    $region70: #{tpu_custom_call.1} parent=1 // pred_check
      _
    $region71: #{tpu_custom_call.1} parent=1 // pred_check_branch
      %67 = sbr.rel (0) target = $region73
    $region72: #{tpu_custom_call.1} parent=1 // pred_region
      _
    $region73: #{tpu_custom_call.1} parent=1 // pred_fallthru
      _
    // Predicated region
    $region74: #{tpu_custom_call.1} parent=1 // pred_check
      _
    $region75: #{tpu_custom_call.1} parent=1 // pred_check_branch
      %69 = sbr.rel (0) target = $region77
    $region76: #{tpu_custom_call.1} parent=1 // pred_region
      _
    $region77: #{tpu_custom_call.1} parent=1 // pred_fallthru
      _
    // Predicated region
    $region78: #{tpu_custom_call.1} parent=1 // pred_check
      _
    $region79: #{tpu_custom_call.1} parent=1 // pred_check_branch
      %71 = sbr.rel (0) target = $region81
    $region80: #{tpu_custom_call.1} parent=1 // pred_region
      _
    $region81: #{tpu_custom_call.1} parent=1 // pred_fallthru
      _
    // Predicated region
    $region82: #{tpu_custom_call.1} parent=1 // pred_check
      _
    $region83: #{tpu_custom_call.1} parent=1 // pred_check_branch
      %73 = sbr.rel (0) target = $region85
    $region84: #{tpu_custom_call.1} parent=1 // pred_region
      _
    $region85: #{tpu_custom_call.1} parent=1 // pred_fallthru
      _
    // Predicated region
    $region86: #{tpu_custom_call.1} parent=1 // pred_check
      _
    $region87: #{tpu_custom_call.1} parent=1 // pred_check_branch
      %75 = sbr.rel (0) target = $region89
    $region88: #{tpu_custom_call.1} parent=1 // pred_region
      _
    $region89: #{tpu_custom_call.1} parent=1 // pred_fallthru
      _
    %v76 = vld [vmem:[%s0] sm:$0xff]
    %v77 = vld [vmem:[%s0 + $0x8] sm:$0xff]
    %v78 = vld [vmem:[%s4] sm:$0xff]
    %v79 = vld [vmem:[%s4 + $0x8] sm:$0xff]
    %v80 = vld [vmem:[%s4 + $0x10] sm:$0x1f]
    %v81 = vld [vmem:[%s5] sm:$0x1]
    %v83 = vlaneseq
    %v84 = vshrl.u32 %v83, 7
    %v85 = vsub.s32 0, %v84
    %v86 = vrot.slane %v81, %v85
    %vm88 = vcmask 171008
    %v90 = vsel %vm88, %v76, 0
    %v93 = vsel %vm88, %v77, 0
    %vm95 = vcmask 1044480
    %v97 = vsel %vm95, %v80, 0
    %99 = vmatprep.subr.mxu0 0.0
    %100 = vmatpush1.msra.mxu0 %v78
    %101 = vmatprep.subr.mxu0 0.0
    %102 = vmatpush1.msra.mxu0 %v79
    %103 = vmatprep.subr.mxu0 0.0
    %104 = vmatpush1.msra.mxu0 %v97
    %105 = vmatprep.subr.mxu0 0.0
    %106 = vmatpush1.msra.mxu0 0.0
    %107 = vmatprep.subr.mxu0 0.0
    %108 = vmatpush1.msra.mxu0 0.0
    %109 = vmatprep.subr.mxu0 0.0
    %110 = vmatpush1.msra.mxu0 0.0
    %111 = vmatprep.subr.mxu0 0.0
    %112 = vmatpush1.msra.mxu0 0.0
    %113 = vmatprep.subr.mxu0 0.0
    %114 = vmatpush1.msra.mxu0 0.0
    %115 = vmatprep.subr.mxu0 0.0
    %116 = vmatpush1.msra.mxu0 0.0
    %117 = vmatprep.subr.mxu0 0.0
    %118 = vmatpush1.msra.mxu0 0.0
    %119 = vmatprep.subr.mxu0 0.0
    %120 = vmatpush1.msra.mxu0 0.0
    %121 = vmatprep.subr.mxu0 0.0
    %122 = vmatpush1.msra.mxu0 0.0
    %123 = vmatprep.subr.mxu0 0.0
    %124 = vmatpush1.msra.mxu0 0.0
    %125 = vmatprep.subr.mxu0 0.0
    %126 = vmatpush1.msra.mxu0 0.0
    %127 = vmatprep.subr.mxu0 0.0
    %128 = vmatpush1.msra.mxu0 0.0
    %129 = vmatprep.subr.mxu0 0.0
    %130 = vmatpush1.msra.mxu0 0.0
    %131 = vmatprep.subr.mxu0 0.0
    %132 = vmatpush1.msra.mxu0 0.0
    %133 = vmatprep.subr.mxu0 0.0
    %134 = vmatpush1.msra.mxu0 0.0
    %135 = vmatprep.subr.mxu0 0.0
    %136 = vmatpush1.msra.mxu0 0.0
    %137 = vmatprep.subr.mxu0 0.0
    %138 = vmatpush1.msra.mxu0 0.0
    %139 = vmatprep.subr.mxu0 0.0
    %140 = vmatpush1.msra.mxu0 0.0
    %141 = vmatprep.subr.mxu0 0.0
    %142 = vmatpush1.msra.mxu0 0.0
    %143 = vmatprep.subr.mxu0 0.0
    %144 = vmatpush1.msra.mxu0 0.0
    %145 = vmatprep.subr.mxu0 0.0
    %146 = vmatpush1.msra.mxu0 0.0
    %147 = vmatprep.subr.mxu0 0.0
    %148 = vmatpush1.msra.mxu0 0.0
    %149 = vmatprep.subr.mxu0 0.0
    %150 = vmatpush1.msra.mxu0 0.0
    %151 = vmatprep.subr.mxu0 0.0
    %152 = vmatpush1.msra.mxu0 0.0
    %153 = vmatprep.subr.mxu0 0.0
    %154 = vmatpush1.msra.mxu0 0.0
    %155 = vmatprep.subr.mxu0 0.0
    %156 = vmatpush1.msra.mxu0 0.0
    %157 = vmatprep.subr.mxu0 0.0
    %158 = vmatpush1.msra.mxu0 0.0
    %159 = vmatprep.subr.mxu0 0.0
    %160 = vmatpush1.msra.mxu0 0.0
    %161 = vmatprep.subr.mxu0 0.0
    %162 = vmatpush1.msra.mxu0 0.0
    %163 = vmatprep.mubr.f32.mxu0 0.0
    %164 = vmatmul.mubr.f32.gmra.mrb[0].mxu0 %v90
    %v165 = vpop.f32.mrb[0].mxu0
    %v166 = vadd.f32 %v86, %v165
    %v167 = vpop.f32.mrb[0].mxu0
    %168 = vmatprep.mubr.f32.mxu0 0.0
    %169 = vmatmul.mubr.f32.gmra.mrb[0].mxu0 %v93
    %v170 = vpop.f32.mrb[0].mxu0
    %v171 = vadd.f32 %v86, %v170
    %v172 = vpop.f32.mrb[0].mxu0
    %173 = vdwg.mxu0
    %v174 = vmax.f32 %v166, 0.0
    %v175 = vmax.f32 %v171, 0.0
    %v176 = vld [vmem:[%s6] sm:$0xff]
    %v177 = vld [vmem:[%s6 + $0x8] sm:$0xff]
    %v178 = vld [vmem:[%s6 + $0x10] sm:$0xff]
    %v179 = vld [vmem:[%s6 + $0x18] sm:$0xff]
    %v180 = vld [vmem:[%s6 + $0x20] sm:$0xff]
    %v181 = vld [vmem:[%s6 + $0x28] sm:$0xff]
    %v182 = vld [vmem:[%s6 + $0x30] sm:$0xff]
    %v183 = vld [vmem:[%s6 + $0x38] sm:$0xff]
    %v184 = vld [vmem:[%s6 + $0x40] sm:$0xff]
    %v185 = vld [vmem:[%s6 + $0x48] sm:$0xff]
    %v186 = vld [vmem:[%s6 + $0x50] sm:$0xff]
    %v187 = vld [vmem:[%s6 + $0x58] sm:$0xff]
    %v188 = vld [vmem:[%s6 + $0x60] sm:$0xff]
    %v189 = vld [vmem:[%s6 + $0x68] sm:$0xff]
    %v190 = vld [vmem:[%s6 + $0x70] sm:$0xff]
    %v191 = vld [vmem:[%s6 + $0x78] sm:$0xff]
    %v192 = vld [vmem:[%s7] sm:$0x1]
    %v194 = vlaneseq
    %v195 = vshrl.u32 %v194, 7
    %v196 = vsub.s32 0, %v195
    %v197 = vrot.slane %v192, %v196
    %199 = vmatprep.subr.mxu0 0.0
    %200 = vmatpush1.msra.mxu0 %v176
    %201 = vmatprep.subr.mxu0 0.0
    %202 = vmatpush1.msra.mxu0 %v177
    %203 = vmatprep.subr.mxu0 0.0
    %204 = vmatpush1.msra.mxu0 %v178
    %205 = vmatprep.subr.mxu0 0.0
    %206 = vmatpush1.msra.mxu0 %v179
    %207 = vmatprep.subr.mxu0 0.0
    %208 = vmatpush1.msra.mxu0 %v180
    %209 = vmatprep.subr.mxu0 0.0
    %210 = vmatpush1.msra.mxu0 %v181
    %211 = vmatprep.subr.mxu0 0.0
    %212 = vmatpush1.msra.mxu0 %v182
    %213 = vmatprep.subr.mxu0 0.0
    %214 = vmatpush1.msra.mxu0 %v183
    %215 = vmatprep.subr.mxu0 0.0
    %216 = vmatpush1.msra.mxu0 %v184
    %217 = vmatprep.subr.mxu0 0.0
    %218 = vmatpush1.msra.mxu0 %v185
    %219 = vmatprep.subr.mxu0 0.0
    %220 = vmatpush1.msra.mxu0 %v186
    %221 = vmatprep.subr.mxu0 0.0
    %222 = vmatpush1.msra.mxu0 %v187
    %223 = vmatprep.subr.mxu0 0.0
    %224 = vmatpush1.msra.mxu0 %v188
    %225 = vmatprep.subr.mxu0 0.0
    %226 = vmatpush1.msra.mxu0 %v189
    %227 = vmatprep.subr.mxu0 0.0
    %228 = vmatpush1.msra.mxu0 %v190
    %229 = vmatprep.subr.mxu0 0.0
    %230 = vmatpush1.msra.mxu0 %v191
    %231 = vmatprep.subr.mxu0 0.0
    %232 = vmatpush1.msra.mxu0 0.0
    %233 = vmatprep.subr.mxu0 0.0
    %234 = vmatpush1.msra.mxu0 0.0
    %235 = vmatprep.subr.mxu0 0.0
    %236 = vmatpush1.msra.mxu0 0.0
    %237 = vmatprep.subr.mxu0 0.0
    %238 = vmatpush1.msra.mxu0 0.0
    %239 = vmatprep.subr.mxu0 0.0
    %240 = vmatpush1.msra.mxu0 0.0
    %241 = vmatprep.subr.mxu0 0.0
    %242 = vmatpush1.msra.mxu0 0.0
    %243 = vmatprep.subr.mxu0 0.0
    %244 = vmatpush1.msra.mxu0 0.0
    %245 = vmatprep.subr.mxu0 0.0
    %246 = vmatpush1.msra.mxu0 0.0
    %247 = vmatprep.subr.mxu0 0.0
    %248 = vmatpush1.msra.mxu0 0.0
    %249 = vmatprep.subr.mxu0 0.0
    %250 = vmatpush1.msra.mxu0 0.0
    %251 = vmatprep.subr.mxu0 0.0
    %252 = vmatpush1.msra.mxu0 0.0
    %253 = vmatprep.subr.mxu0 0.0
    %254 = vmatpush1.msra.mxu0 0.0
    %255 = vmatprep.subr.mxu0 0.0
    %256 = vmatpush1.msra.mxu0 0.0
    %257 = vmatprep.subr.mxu0 0.0
    %258 = vmatpush1.msra.mxu0 0.0
    %259 = vmatprep.subr.mxu0 0.0
    %260 = vmatpush1.msra.mxu0 0.0
    %261 = vmatprep.subr.mxu0 0.0
    %262 = vmatpush1.msra.mxu0 0.0
    %263 = vmatprep.mubr.f32.mxu0 0.0
    %264 = vmatmul.mubr.f32.gmra.mrb[0].mxu0 %v174
    %v265 = vpop.f32.mrb[0].mxu0
    %v266 = vadd.f32 %v197, %v265
    %v267 = vpop.f32.mrb[0].mxu0
    %268 = vmatprep.mubr.f32.mxu0 0.0
    %269 = vmatmul.mubr.f32.gmra.mrb[0].mxu0 %v175
    %v270 = vpop.f32.mrb[0].mxu0
    %v271 = vadd.f32 %v197, %v270
    %v272 = vpop.f32.mrb[0].mxu0
    %273 = vdwg.mxu0
    %v274 = vld [vmem:[%s8] sm:$0xff]
    %v275 = vld [vmem:[%s8 + $0x8] sm:$0xff]
    %v276 = vld [vmem:[%s8 + $0x10] sm:$0xff]
    %v277 = vld [vmem:[%s8 + $0x18] sm:$0xff]
    %v278 = vld [vmem:[%s8 + $0x20] sm:$0xff]
    %v279 = vld [vmem:[%s8 + $0x28] sm:$0xff]
    %v280 = vld [vmem:[%s8 + $0x30] sm:$0xff]
    %v281 = vld [vmem:[%s8 + $0x38] sm:$0xff]
    %v282 = vld [vmem:[%s8 + $0x40] sm:$0xff]
    %v283 = vld [vmem:[%s8 + $0x48] sm:$0xff]
    %v284 = vld [vmem:[%s8 + $0x50] sm:$0xff]
    %v285 = vld [vmem:[%s8 + $0x58] sm:$0xff]
    %v286 = vld [vmem:[%s8 + $0x60] sm:$0xff]
    %v287 = vld [vmem:[%s8 + $0x68] sm:$0xff]
    %v288 = vld [vmem:[%s8 + $0x70] sm:$0xff]
    %v289 = vld [vmem:[%s8 + $0x78] sm:$0xff]
    %v290 = vld [vmem:[%s9] sm:$0x1]
    %v292 = vlaneseq
    %v293 = vshrl.u32 %v292, 7
    %v294 = vsub.s32 0, %v293
    %v295 = vrot.slane %v290, %v294
    %297 = vmatprep.subr.mxu0 0.0
    %298 = vmatpush1.msra.mxu0 %v274
    %299 = vmatprep.subr.mxu0 0.0
    %300 = vmatpush1.msra.mxu0 %v275
    %301 = vmatprep.subr.mxu0 0.0
    %302 = vmatpush1.msra.mxu0 %v276
    %303 = vmatprep.subr.mxu0 0.0
    %304 = vmatpush1.msra.mxu0 %v277
    %305 = vmatprep.subr.mxu0 0.0
    %306 = vmatpush1.msra.mxu0 %v278
    %307 = vmatprep.subr.mxu0 0.0
    %308 = vmatpush1.msra.mxu0 %v279
    %309 = vmatprep.subr.mxu0 0.0
    %310 = vmatpush1.msra.mxu0 %v280
    %311 = vmatprep.subr.mxu0 0.0
    %312 = vmatpush1.msra.mxu0 %v281
    %313 = vmatprep.subr.mxu0 0.0
    %314 = vmatpush1.msra.mxu0 %v282
    %315 = vmatprep.subr.mxu0 0.0
    %316 = vmatpush1.msra.mxu0 %v283
    %317 = vmatprep.subr.mxu0 0.0
    %318 = vmatpush1.msra.mxu0 %v284
    %319 = vmatprep.subr.mxu0 0.0
    %320 = vmatpush1.msra.mxu0 %v285
    %321 = vmatprep.subr.mxu0 0.0
    %322 = vmatpush1.msra.mxu0 %v286
    %323 = vmatprep.subr.mxu0 0.0
    %324 = vmatpush1.msra.mxu0 %v287
    %325 = vmatprep.subr.mxu0 0.0
    %326 = vmatpush1.msra.mxu0 %v288
    %327 = vmatprep.subr.mxu0 0.0
    %328 = vmatpush1.msra.mxu0 %v289
    %329 = vmatprep.subr.mxu0 0.0
    %330 = vmatpush1.msra.mxu0 0.0
    %331 = vmatprep.subr.mxu0 0.0
    %332 = vmatpush1.msra.mxu0 0.0
    %333 = vmatprep.subr.mxu0 0.0
    %334 = vmatpush1.msra.mxu0 0.0
    %335 = vmatprep.subr.mxu0 0.0
    %336 = vmatpush1.msra.mxu0 0.0
    %337 = vmatprep.subr.mxu0 0.0
    %338 = vmatpush1.msra.mxu0 0.0
    %339 = vmatprep.subr.mxu0 0.0
    %340 = vmatpush1.msra.mxu0 0.0
    %341 = vmatprep.subr.mxu0 0.0
    %342 = vmatpush1.msra.mxu0 0.0
    %343 = vmatprep.subr.mxu0 0.0
    %344 = vmatpush1.msra.mxu0 0.0
    %345 = vmatprep.subr.mxu0 0.0
    %346 = vmatpush1.msra.mxu0 0.0
    %347 = vmatprep.subr.mxu0 0.0
    %348 = vmatpush1.msra.mxu0 0.0
    %349 = vmatprep.subr.mxu0 0.0
    %350 = vmatpush1.msra.mxu0 0.0
    %351 = vmatprep.subr.mxu0 0.0
    %352 = vmatpush1.msra.mxu0 0.0
    %353 = vmatprep.subr.mxu0 0.0
    %354 = vmatpush1.msra.mxu0 0.0
    %355 = vmatprep.subr.mxu0 0.0
    %356 = vmatpush1.msra.mxu0 0.0
    %357 = vmatprep.subr.mxu0 0.0
    %358 = vmatpush1.msra.mxu0 0.0
    %359 = vmatprep.subr.mxu0 0.0
    %360 = vmatpush1.msra.mxu0 0.0
    %361 = vmatprep.mubr.f32.mxu0 0.0
    %362 = vmatmul.mubr.f32.gmra.mrb[0].mxu0 %v174
    %v363 = vpop.f32.mrb[0].mxu0
    %v364 = vadd.f32 %v295, %v363
    %v365 = vpop.f32.mrb[0].mxu0
    %366 = vmatprep.mubr.f32.mxu0 0.0
    %367 = vmatmul.mubr.f32.gmra.mrb[0].mxu0 %v175
    %v368 = vpop.f32.mrb[0].mxu0
    %v369 = vadd.f32 %v295, %v368
    %v370 = vpop.f32.mrb[0].mxu0
    %371 = vdwg.mxu0
    %v372 = vmax.f32 %v364, 0.0
    %v373 = vmax.f32 %v369, 0.0
    %vm374 = vcmp.ne.f32.partialorder %v364, %v364
    %vm375 = vcmp.ne.f32.partialorder %v369, %v369
    %v376 = vadd.f32 %v364, 0.0
    %v377 = vadd.f32 %v369, 0.0
    %v378 = vand.u32 2147483647, %v364
    %v379 = vand.u32 2147483647, %v369
    %v380 = vsub.f32 0.0, %v378
    %v381 = vsub.f32 0.0, %v379
    %v382 = vmul.f32 %v380, 1.442695
    %v383 = vpow.pop %v382
    %v384 = vmul.f32 %v381, 1.442695
    %v385 = vpow.pop %v384
    %v386 = vadd.f32 %v383, 1.0
    %v387 = vlog2.pop %v386
    %v388 = vmul.f32 %v387, 0.6931472
    %v389 = vmul.f32 -0.5, %v383
    %v390 = vadd.f32 %v389, 1.0
    %v391 = vmul.f32 %v390, %v383
    %v392 = vand.u32 2147483647, %v383
    %vm393 = vcmp.lt.f32.partialorder %v392, 0.0004427343
    %v394 = vsel %vm393, %v391, %v388
    %v395 = vadd.f32 %v385, 1.0
    %v396 = vlog2.pop %v395
    %v397 = vmul.f32 %v396, 0.6931472
    %v398 = vmul.f32 -0.5, %v385
    %v399 = vadd.f32 %v398, 1.0
    %v400 = vmul.f32 %v399, %v385
    %v401 = vand.u32 2147483647, %v385
    %vm402 = vcmp.lt.f32.partialorder %v401, 0.0004427343
    %v403 = vsel %vm402, %v400, %v397
    %v404 = vadd.f32 %v372, %v394
    %v405 = vadd.f32 %v373, %v403
    %v406 = vsel %vm374, %v376, %v404
    %v407 = vsel %vm375, %v377, %v405
    %v408 = vmax.f32 %v406, 1e-07
    %v409 = vmax.f32 %v407, 1e-07
    %v410 = vrcp.pop %v408
    %v411 = vmul.f32 1.0, %v410
    %v412 = vrcp.pop %v409
    %v413 = vmul.f32 1.0, %v412
    %vm414 = vcmask 261120
    %v415 = vsel %vm414, %v411, 0.0
    %v416 = vrot.slane %v415, 4
    %v417 = vadd.f32 %v415, %v416
    %v418 = vrot.slane %v417, 2
    %v419 = vadd.f32 %v417, %v418
    %v420 = vrot.slane %v419, 1
    %v421 = vadd.f32 %v419, %v420
    %v422 = vsel %vm414, %v413, 0.0
    %v423 = vrot.slane %v422, 4
    %v424 = vadd.f32 %v422, %v423
    %v425 = vrot.slane %v424, 2
    %v426 = vadd.f32 %v424, %v425
    %v427 = vrot.slane %v426, 1
    %v428 = vadd.f32 %v426, %v427
    %v429 = vrcp.pop %v421
    %v430 = vmul.f32 1.0, %v429
    %v431 = vrcp.pop %v428
    %v432 = vmul.f32 1.0, %v431
    %v433 = vmul.f32 %v266, %v411
    %v434 = vmul.f32 %v271, %v413
    %v435 = vsel %vm414, %v433, 0.0
    %v436 = vrot.slane %v435, 4
    %v437 = vadd.f32 %v435, %v436
    %v438 = vrot.slane %v437, 2
    %v439 = vadd.f32 %v437, %v438
    %v440 = vrot.slane %v439, 1
    %v441 = vadd.f32 %v439, %v440
    %v442 = vsel %vm414, %v434, 0.0
    %v443 = vrot.slane %v442, 4
    %v444 = vadd.f32 %v442, %v443
    %v445 = vrot.slane %v444, 2
    %v446 = vadd.f32 %v444, %v445
    %v447 = vrot.slane %v446, 1
    %v448 = vadd.f32 %v446, %v447
    %v449 = vmul.f32 %v430, %v441
    %v450 = vmul.f32 %v432, %v448
    %v451 = vrsqrt.pop %v430
    %v452 = vmul.f32 %v430, %v451
    %vm453 = vcmp.eq.f32.partialorder %v430, inf
    %v454 = vsel %vm453, %v430, %v452
    %vm455 = vcmp.eq.f32.partialorder %v430, 0.0
    %v456 = vand.u32 %v430, 2147483648
    %v457 = vsel %vm455, %v456, %v454
    %v458 = vrsqrt.pop %v432
    %v459 = vmul.f32 %v432, %v458
    %vm460 = vcmp.eq.f32.partialorder %v432, inf
    %v461 = vsel %vm460, %v432, %v459
    %vm462 = vcmp.eq.f32.partialorder %v432, 0.0
    %v463 = vand.u32 %v432, 2147483648
    %v464 = vsel %vm462, %v463, %v461
    %v465 = vld [vmem:[%s2] sm:$0x3]
    %v467 = vrot.slane %v465, 1
    %v470 = vmul.f32 %v457, %v465
    %v471 = vmul.f32 %v464, %v467
    %v472 = vadd.f32 %v449, %v470
    %v473 = vadd.f32 %v450, %v471
    %v476 = vrot.slane %v473, 7
    %vm477 = vcmask 1041409
    %v478 = vsel %vm477, %v476, %v472
    %vm480 = vcmask 254976
    %481 = vst.msk [vmem:[#allocation3] sm:$0x3] %vm480, %v478
    %v482 = vld [vmem:[%s1] sm:$0xff]
    %v483 = vld [vmem:[%s1 + $0x8] sm:$0xff]
    %v484 = vld [vmem:[%s10] sm:$0x1]
    %v486 = vlaneseq
    %v487 = vshrl.u32 %v486, 7
    %v488 = vsub.s32 0, %v487
    %v489 = vrot.slane %v484, %v488
    %v491 = vmul.f32 %v482, %v489
    %v492 = vmul.f32 %v483, %v489
    %vm493 = vcmask 130048
    %v494 = vsel %vm493, %v491, 0.0
    %495 = vadd.xlane.f32.xlu0 %v494
    %v496 = vpop.xlane.xlu0 %495
    %v497 = vsel %vm493, %v492, 0.0
    %498 = vadd.xlane.f32.xlu0 %v497
    %v499 = vpop.xlane.xlu0 %498
    %v500 = vld [vmem:[%s11] sm:$0xff]
    %v501 = vld [vmem:[%s11 + $0x8] sm:$0xff]
    %v502 = vld [vmem:[%s11 + $0x10] sm:$0xff]
    %v503 = vld [vmem:[%s11 + $0x18] sm:$0xff]
    %v504 = vsel %vm414, %v478, 0
    %506 = vmatprep.subr.mxu0 0.0
    %507 = vmatpush1.msra.mxu0 %v500
    %508 = vmatprep.subr.mxu0 0.0
    %509 = vmatpush1.msra.mxu0 %v501
    %510 = vmatprep.subr.mxu0 0.0
    %511 = vmatpush1.msra.mxu0 %v502
    %512 = vmatprep.subr.mxu0 0.0
    %513 = vmatpush1.msra.mxu0 %v503
    %514 = vmatprep.subr.mxu0 0.0
    %515 = vmatpush1.msra.mxu0 0.0
    %516 = vmatprep.subr.mxu0 0.0
    %517 = vmatpush1.msra.mxu0 0.0
    %518 = vmatprep.subr.mxu0 0.0
    %519 = vmatpush1.msra.mxu0 0.0
    %520 = vmatprep.subr.mxu0 0.0
    %521 = vmatpush1.msra.mxu0 0.0
    %522 = vmatprep.subr.mxu0 0.0
    %523 = vmatpush1.msra.mxu0 0.0
    %524 = vmatprep.subr.mxu0 0.0
    %525 = vmatpush1.msra.mxu0 0.0
    %526 = vmatprep.subr.mxu0 0.0
    %527 = vmatpush1.msra.mxu0 0.0
    %528 = vmatprep.subr.mxu0 0.0
    %529 = vmatpush1.msra.mxu0 0.0
    %530 = vmatprep.subr.mxu0 0.0
    %531 = vmatpush1.msra.mxu0 0.0
    %532 = vmatprep.subr.mxu0 0.0
    %533 = vmatpush1.msra.mxu0 0.0
    %534 = vmatprep.subr.mxu0 0.0
    %535 = vmatpush1.msra.mxu0 0.0
    %536 = vmatprep.subr.mxu0 0.0
    %537 = vmatpush1.msra.mxu0 0.0
    %538 = vmatprep.subr.mxu0 0.0
    %539 = vmatpush1.msra.mxu0 0.0
    %540 = vmatprep.subr.mxu0 0.0
    %541 = vmatpush1.msra.mxu0 0.0
    %542 = vmatprep.subr.mxu0 0.0
    %543 = vmatpush1.msra.mxu0 0.0
    %544 = vmatprep.subr.mxu0 0.0
    %545 = vmatpush1.msra.mxu0 0.0
    %546 = vmatprep.subr.mxu0 0.0
    %547 = vmatpush1.msra.mxu0 0.0
    %548 = vmatprep.subr.mxu0 0.0
    %549 = vmatpush1.msra.mxu0 0.0
    %550 = vmatprep.subr.mxu0 0.0
    %551 = vmatpush1.msra.mxu0 0.0
    %552 = vmatprep.subr.mxu0 0.0
    %553 = vmatpush1.msra.mxu0 0.0
    %554 = vmatprep.subr.mxu0 0.0
    %555 = vmatpush1.msra.mxu0 0.0
    %556 = vmatprep.subr.mxu0 0.0
    %557 = vmatpush1.msra.mxu0 0.0
    %558 = vmatprep.subr.mxu0 0.0
    %559 = vmatpush1.msra.mxu0 0.0
    %560 = vmatprep.subr.mxu0 0.0
    %561 = vmatpush1.msra.mxu0 0.0
    %562 = vmatprep.subr.mxu0 0.0
    %563 = vmatpush1.msra.mxu0 0.0
    %564 = vmatprep.subr.mxu0 0.0
    %565 = vmatpush1.msra.mxu0 0.0
    %566 = vmatprep.subr.mxu0 0.0
    %567 = vmatpush1.msra.mxu0 0.0
    %568 = vmatprep.subr.mxu0 0.0
    %569 = vmatpush1.msra.mxu0 0.0
    %570 = vmatprep.mubr.f32.mxu0 0.0
    %571 = vmatmul.mubr.f32.gmra.mrb[0].mxu0 %v504
    %v572 = vpop.f32.mrb[0].mxu0
    %v573 = vadd.f32 0.0, %v572
    %v574 = vpop.f32.mrb[0].mxu0
    %575 = vdwg.mxu0
    %v578 = vunpack.c.l.s4 1966171168
    %v579 = vunpack.c.0.s8 %v578
    %v580 = vlaneseq
    %v581 = vshrl.u32 %v580, 7
    %v582 = vsub.s32 %v579, %v581
    %v583 = vrot.slane %v573, %v582
    %v584 = vcombine.high %v583, %v583
    %v586 = vunpack.c.l.s4 1966171168
    %v587 = vunpack.c.0.s8 %v586
    %v588 = vlaneseq
    %v589 = vshrl.u32 %v588, 7
    %v590 = vsub.s32 %v587, %v589
    %v591 = vrot.slane %v583, %v590
    %v593 = vunpack.c.l.s4 1966171168
    %v594 = vunpack.c.0.s8 %v593
    %v595 = vlaneseq
    %v596 = vshrl.u32 %v595, 7
    %v597 = vsub.s32 %v594, %v596
    %v598 = vrot.slane %v584, %v597
    %v599 = vlaneseq
    %v600 = vshrl.u32 %v599, 7
    %v601 = vsub.s32 0, %v600
    %v602 = vrot.slane %v591, %v601
    %v603 = vlaneseq
    %v604 = vshrl.u32 %v603, 7
    %v605 = vsub.s32 0, %v604
    %v606 = vrot.slane %v598, %v605
    %v609 = vadd.f32 %v496, %v602
    %v610 = vadd.f32 %v499, %v606
    %s611 = sld [smem:[#allocation2]]
    %v612 = vstv %s611
    %v613 = vadd.f32 %v609, %v612
    %v614 = vadd.f32 %v610, %v612
    %vm615 = vcmask 31744
    %v616 = vsel %vm615, %v613, -inf
    %617 = vmax.xlane.f32.xlu0 %v616
    %v618 = vpop.xlane.xlu0 %617
    %v619 = vsel %vm615, %v614, -inf
    %620 = vmax.xlane.f32.xlu0 %v619
    %v621 = vpop.xlane.xlu0 %620
    %v622 = vsub.f32 %v613, %v618
    %v623 = vsub.f32 %v614, %v621
    %v624 = vmul.f32 %v622, 1.442695
    %v625 = vpow.pop %v624
    %v626 = vmul.f32 %v623, 1.442695
    %v627 = vpow.pop %v626
    %v628 = vsel %vm615, %v625, 0.0
    %629 = vadd.xlane.f32.xlu0 %v628
    %v630 = vpop.xlane.xlu0 %629
    %v631 = vsel %vm615, %v627, 0.0
    %632 = vadd.xlane.f32.xlu0 %v631
    %v633 = vpop.xlane.xlu0 %632
    %v634 = vrcp.pop %v630
    %v635 = vmul.f32 %v625, %v634
    %v636 = vrcp.pop %v633
    %v637 = vmul.f32 %v627, %v636
    %v638 = vld [vmem:[%s13] sm:$0xf]
    %v640 = vsel %vm615, %v635, 0
    %v643 = vsel %vm615, %v637, 0
    %vm645 = vcmask 1043456
    %v647 = vsel %vm645, %v638, 0
    %649 = vmatprep.subr.mxu0 0.0
    %650 = vmatpush1.msra.mxu0 %v647
    %651 = vmatprep.subr.mxu0 0.0
    %652 = vmatpush1.msra.mxu0 0.0
    %653 = vmatprep.subr.mxu0 0.0
    %654 = vmatpush1.msra.mxu0 0.0
    %655 = vmatprep.subr.mxu0 0.0
    %656 = vmatpush1.msra.mxu0 0.0
    %657 = vmatprep.subr.mxu0 0.0
    %658 = vmatpush1.msra.mxu0 0.0
    %659 = vmatprep.subr.mxu0 0.0
    %660 = vmatpush1.msra.mxu0 0.0
    %661 = vmatprep.subr.mxu0 0.0
    %662 = vmatpush1.msra.mxu0 0.0
    %663 = vmatprep.subr.mxu0 0.0
    %664 = vmatpush1.msra.mxu0 0.0
    %665 = vmatprep.subr.mxu0 0.0
    %666 = vmatpush1.msra.mxu0 0.0
    %667 = vmatprep.subr.mxu0 0.0
    %668 = vmatpush1.msra.mxu0 0.0
    %669 = vmatprep.subr.mxu0 0.0
    %670 = vmatpush1.msra.mxu0 0.0
    %671 = vmatprep.subr.mxu0 0.0
    %672 = vmatpush1.msra.mxu0 0.0
    %673 = vmatprep.subr.mxu0 0.0
    %674 = vmatpush1.msra.mxu0 0.0
    %675 = vmatprep.subr.mxu0 0.0
    %676 = vmatpush1.msra.mxu0 0.0
    %677 = vmatprep.subr.mxu0 0.0
    %678 = vmatpush1.msra.mxu0 0.0
    %679 = vmatprep.subr.mxu0 0.0
    %680 = vmatpush1.msra.mxu0 0.0
    %681 = vmatprep.subr.mxu0 0.0
    %682 = vmatpush1.msra.mxu0 0.0
    %683 = vmatprep.subr.mxu0 0.0
    %684 = vmatpush1.msra.mxu0 0.0
    %685 = vmatprep.subr.mxu0 0.0
    %686 = vmatpush1.msra.mxu0 0.0
    %687 = vmatprep.subr.mxu0 0.0
    %688 = vmatpush1.msra.mxu0 0.0
    %689 = vmatprep.subr.mxu0 0.0
    %690 = vmatpush1.msra.mxu0 0.0
    %691 = vmatprep.subr.mxu0 0.0
    %692 = vmatpush1.msra.mxu0 0.0
    %693 = vmatprep.subr.mxu0 0.0
    %694 = vmatpush1.msra.mxu0 0.0
    %695 = vmatprep.subr.mxu0 0.0
    %696 = vmatpush1.msra.mxu0 0.0
    %697 = vmatprep.subr.mxu0 0.0
    %698 = vmatpush1.msra.mxu0 0.0
    %699 = vmatprep.subr.mxu0 0.0
    %700 = vmatpush1.msra.mxu0 0.0
    %701 = vmatprep.subr.mxu0 0.0
    %702 = vmatpush1.msra.mxu0 0.0
    %703 = vmatprep.subr.mxu0 0.0
    %704 = vmatpush1.msra.mxu0 0.0
    %705 = vmatprep.subr.mxu0 0.0
    %706 = vmatpush1.msra.mxu0 0.0
    %707 = vmatprep.subr.mxu0 0.0
    %708 = vmatpush1.msra.mxu0 0.0
    %709 = vmatprep.subr.mxu0 0.0
    %710 = vmatpush1.msra.mxu0 0.0
    %711 = vmatprep.subr.mxu0 0.0
    %712 = vmatpush1.msra.mxu0 0.0
    %713 = vmatprep.mubr.f32.mxu0 0.0
    %714 = vmatmul.mubr.f32.gmra.mrb[0].mxu0 %v640
    %v715 = vpop.f32.mrb[0].mxu0
    %v716 = vadd.f32 0.0, %v715
    %v717 = vpop.f32.mrb[0].mxu0
    %718 = vmatprep.mubr.f32.mxu0 0.0
    %719 = vmatmul.mubr.f32.gmra.mrb[0].mxu0 %v643
    %v720 = vpop.f32.mrb[0].mxu0
    %v721 = vadd.f32 0.0, %v720
    %v722 = vpop.f32.mrb[0].mxu0
    %723 = vdwg.mxu0
    %v724 = vlaneseq
    %v725 = vshrl.u32 %v724, 7
    %v726 = vsub.s32 0, %v725
    %v727 = vrot.slane %v472, %v726
    %v728 = vlaneseq
    %v729 = vshrl.u32 %v728, 7
    %v730 = vsub.s32 0, %v729
    %v731 = vrot.slane %v473, %v730
    %v732 = vmul.f32 %v716, %v727
    %v733 = vmul.f32 %v721, %v731
    %v734 = vld [vmem:[%s14] sm:$0xff]
    %v735 = vld [vmem:[%s14 + $0x8] sm:$0xff]
    %v736 = vld [vmem:[%s14 + $0x10] sm:$0xff]
    %v737 = vld [vmem:[%s14 + $0x18] sm:$0xff]
    %v739 = vsel %vm414, %v732, 0
    %v742 = vsel %vm414, %v733, 0
    %744 = vmatprep.subr.mxu0 0.0
    %745 = vmatpush1.msra.mxu0 %v734
    %746 = vmatprep.subr.mxu0 0.0
    %747 = vmatpush1.msra.mxu0 %v735
    %748 = vmatprep.subr.mxu0 0.0
    %749 = vmatpush1.msra.mxu0 %v736
    %750 = vmatprep.subr.mxu0 0.0
    %751 = vmatpush1.msra.mxu0 %v737
    %752 = vmatprep.subr.mxu0 0.0
    %753 = vmatpush1.msra.mxu0 0.0
    %754 = vmatprep.subr.mxu0 0.0
    %755 = vmatpush1.msra.mxu0 0.0
    %756 = vmatprep.subr.mxu0 0.0
    %757 = vmatpush1.msra.mxu0 0.0
    %758 = vmatprep.subr.mxu0 0.0
    %759 = vmatpush1.msra.mxu0 0.0
    %760 = vmatprep.subr.mxu0 0.0
    %761 = vmatpush1.msra.mxu0 0.0
    %762 = vmatprep.subr.mxu0 0.0
    %763 = vmatpush1.msra.mxu0 0.0
    %764 = vmatprep.subr.mxu0 0.0
    %765 = vmatpush1.msra.mxu0 0.0
    %766 = vmatprep.subr.mxu0 0.0
    %767 = vmatpush1.msra.mxu0 0.0
    %768 = vmatprep.subr.mxu0 0.0
    %769 = vmatpush1.msra.mxu0 0.0
    %770 = vmatprep.subr.mxu0 0.0
    %771 = vmatpush1.msra.mxu0 0.0
    %772 = vmatprep.subr.mxu0 0.0
    %773 = vmatpush1.msra.mxu0 0.0
    %774 = vmatprep.subr.mxu0 0.0
    %775 = vmatpush1.msra.mxu0 0.0
    %776 = vmatprep.subr.mxu0 0.0
    %777 = vmatpush1.msra.mxu0 0.0
    %778 = vmatprep.subr.mxu0 0.0
    %779 = vmatpush1.msra.mxu0 0.0
    %780 = vmatprep.subr.mxu0 0.0
    %781 = vmatpush1.msra.mxu0 0.0
    %782 = vmatprep.subr.mxu0 0.0
    %783 = vmatpush1.msra.mxu0 0.0
    %784 = vmatprep.subr.mxu0 0.0
    %785 = vmatpush1.msra.mxu0 0.0
    %786 = vmatprep.subr.mxu0 0.0
    %787 = vmatpush1.msra.mxu0 0.0
    %788 = vmatprep.subr.mxu0 0.0
    %789 = vmatpush1.msra.mxu0 0.0
    %790 = vmatprep.subr.mxu0 0.0
    %791 = vmatpush1.msra.mxu0 0.0
    %792 = vmatprep.subr.mxu0 0.0
    %793 = vmatpush1.msra.mxu0 0.0
    %794 = vmatprep.subr.mxu0 0.0
    %795 = vmatpush1.msra.mxu0 0.0
    %796 = vmatprep.subr.mxu0 0.0
    %797 = vmatpush1.msra.mxu0 0.0
    %798 = vmatprep.subr.mxu0 0.0
    %799 = vmatpush1.msra.mxu0 0.0
    %800 = vmatprep.subr.mxu0 0.0
    %801 = vmatpush1.msra.mxu0 0.0
    %802 = vmatprep.subr.mxu0 0.0
    %803 = vmatpush1.msra.mxu0 0.0
    %804 = vmatprep.subr.mxu0 0.0
    %805 = vmatpush1.msra.mxu0 0.0
    %806 = vmatprep.subr.mxu0 0.0
    %807 = vmatpush1.msra.mxu0 0.0
    %808 = vmatprep.mubr.f32.mxu0 0.0
    %809 = vmatmul.mubr.f32.gmra.mrb[0].mxu0 %v739
    %v810 = vpop.f32.mrb[0].mxu0
    %v811 = vadd.f32 0.0, %v810
    %v812 = vpop.f32.mrb[0].mxu0
    %813 = vmatprep.mubr.f32.mxu0 0.0
    %814 = vmatmul.mubr.f32.gmra.mrb[0].mxu0 %v742
    %v815 = vpop.f32.mrb[0].mxu0
    %v816 = vadd.f32 0.0, %v815
    %v817 = vpop.f32.mrb[0].mxu0
    %818 = vdwg.mxu0
    %v819 = vld [vmem:[%s15] sm:$0xff]
    %v820 = vld [vmem:[%s15 + $0x8] sm:$0xff]
    %v821 = vld [vmem:[%s16] sm:$0xff]
    %vm822 = vcmask 64512
    %v824 = vsel %vm822, %v811, 0
    %v827 = vsel %vm822, %v816, 0
    %829 = vmatprep.subr.mxu0 0.0
    %830 = vmatpush1.msra.mxu0 %v821
    %831 = vmatprep.subr.mxu0 0.0
    %832 = vmatpush1.msra.mxu0 0.0
    %833 = vmatprep.subr.mxu0 0.0
    %834 = vmatpush1.msra.mxu0 0.0
    %835 = vmatprep.subr.mxu0 0.0
    %836 = vmatpush1.msra.mxu0 0.0
    %837 = vmatprep.subr.mxu0 0.0
    %838 = vmatpush1.msra.mxu0 0.0
    %839 = vmatprep.subr.mxu0 0.0
    %840 = vmatpush1.msra.mxu0 0.0
    %841 = vmatprep.subr.mxu0 0.0
    %842 = vmatpush1.msra.mxu0 0.0
    %843 = vmatprep.subr.mxu0 0.0
    %844 = vmatpush1.msra.mxu0 0.0
    %845 = vmatprep.subr.mxu0 0.0
    %846 = vmatpush1.msra.mxu0 0.0
    %847 = vmatprep.subr.mxu0 0.0
    %848 = vmatpush1.msra.mxu0 0.0
    %849 = vmatprep.subr.mxu0 0.0
    %850 = vmatpush1.msra.mxu0 0.0
    %851 = vmatprep.subr.mxu0 0.0
    %852 = vmatpush1.msra.mxu0 0.0
    %853 = vmatprep.subr.mxu0 0.0
    %854 = vmatpush1.msra.mxu0 0.0
    %855 = vmatprep.subr.mxu0 0.0
    %856 = vmatpush1.msra.mxu0 0.0
    %857 = vmatprep.subr.mxu0 0.0
    %858 = vmatpush1.msra.mxu0 0.0
    %859 = vmatprep.subr.mxu0 0.0
    %860 = vmatpush1.msra.mxu0 0.0
    %861 = vmatprep.subr.mxu0 0.0
    %862 = vmatpush1.msra.mxu0 0.0
    %863 = vmatprep.subr.mxu0 0.0
    %864 = vmatpush1.msra.mxu0 0.0
    %865 = vmatprep.subr.mxu0 0.0
    %866 = vmatpush1.msra.mxu0 0.0
    %867 = vmatprep.subr.mxu0 0.0
    %868 = vmatpush1.msra.mxu0 0.0
    %869 = vmatprep.subr.mxu0 0.0
    %870 = vmatpush1.msra.mxu0 0.0
    %871 = vmatprep.subr.mxu0 0.0
    %872 = vmatpush1.msra.mxu0 0.0
    %873 = vmatprep.subr.mxu0 0.0
    %874 = vmatpush1.msra.mxu0 0.0
    %875 = vmatprep.subr.mxu0 0.0
    %876 = vmatpush1.msra.mxu0 0.0
    %877 = vmatprep.subr.mxu0 0.0
    %878 = vmatpush1.msra.mxu0 0.0
    %879 = vmatprep.subr.mxu0 0.0
    %880 = vmatpush1.msra.mxu0 0.0
    %881 = vmatprep.subr.mxu0 0.0
    %882 = vmatpush1.msra.mxu0 0.0
    %883 = vmatprep.subr.mxu0 0.0
    %884 = vmatpush1.msra.mxu0 0.0
    %885 = vmatprep.subr.mxu0 0.0
    %886 = vmatpush1.msra.mxu0 0.0
    %887 = vmatprep.subr.mxu0 0.0
    %888 = vmatpush1.msra.mxu0 0.0
    %889 = vmatprep.subr.mxu0 0.0
    %890 = vmatpush1.msra.mxu0 0.0
    %891 = vmatprep.subr.mxu0 0.0
    %892 = vmatpush1.msra.mxu0 0.0
    %893 = vmatprep.mubr.f32.mxu0 0.0
    %894 = vmatmul.mubr.f32.gmra.mrb[0].mxu0 %v824
    %v895 = vpop.f32.mrb[0].mxu0
    %v896 = vadd.f32 0.0, %v895
    %v897 = vpop.f32.mrb[0].mxu0
    %898 = vmatprep.mubr.f32.mxu0 0.0
    %899 = vmatmul.mubr.f32.gmra.mrb[0].mxu0 %v827
    %v900 = vpop.f32.mrb[0].mxu0
    %v901 = vadd.f32 0.0, %v900
    %v902 = vpop.f32.mrb[0].mxu0
    %903 = vdwg.mxu0
    %v905 = vsel %vm493, %v482, 0
    %v908 = vsel %vm493, %v483, 0
    %910 = vmatprep.subr.mxu0 0.0
    %911 = vmatpush1.msra.mxu0 %v819
    %912 = vmatprep.subr.mxu0 0.0
    %913 = vmatpush1.msra.mxu0 %v820
    %914 = vmatprep.subr.mxu0 0.0
    %915 = vmatpush1.msra.mxu0 0.0
    %916 = vmatprep.subr.mxu0 0.0
    %917 = vmatpush1.msra.mxu0 0.0
    %918 = vmatprep.subr.mxu0 0.0
    %919 = vmatpush1.msra.mxu0 0.0
    %920 = vmatprep.subr.mxu0 0.0
    %921 = vmatpush1.msra.mxu0 0.0
    %922 = vmatprep.subr.mxu0 0.0
    %923 = vmatpush1.msra.mxu0 0.0
    %924 = vmatprep.subr.mxu0 0.0
    %925 = vmatpush1.msra.mxu0 0.0
    %926 = vmatprep.subr.mxu0 0.0
    %927 = vmatpush1.msra.mxu0 0.0
    %928 = vmatprep.subr.mxu0 0.0
    %929 = vmatpush1.msra.mxu0 0.0
    %930 = vmatprep.subr.mxu0 0.0
    %931 = vmatpush1.msra.mxu0 0.0
    %932 = vmatprep.subr.mxu0 0.0
    %933 = vmatpush1.msra.mxu0 0.0
    %934 = vmatprep.subr.mxu0 0.0
    %935 = vmatpush1.msra.mxu0 0.0
    %936 = vmatprep.subr.mxu0 0.0
    %937 = vmatpush1.msra.mxu0 0.0
    %938 = vmatprep.subr.mxu0 0.0
    %939 = vmatpush1.msra.mxu0 0.0
    %940 = vmatprep.subr.mxu0 0.0
    %941 = vmatpush1.msra.mxu0 0.0
    %942 = vmatprep.subr.mxu0 0.0
    %943 = vmatpush1.msra.mxu0 0.0
    %944 = vmatprep.subr.mxu0 0.0
    %945 = vmatpush1.msra.mxu0 0.0
    %946 = vmatprep.subr.mxu0 0.0
    %947 = vmatpush1.msra.mxu0 0.0
    %948 = vmatprep.subr.mxu0 0.0
    %949 = vmatpush1.msra.mxu0 0.0
    %950 = vmatprep.subr.mxu0 0.0
    %951 = vmatpush1.msra.mxu0 0.0
    %952 = vmatprep.subr.mxu0 0.0
    %953 = vmatpush1.msra.mxu0 0.0
    %954 = vmatprep.subr.mxu0 0.0
    %955 = vmatpush1.msra.mxu0 0.0
    %956 = vmatprep.subr.mxu0 0.0
    %957 = vmatpush1.msra.mxu0 0.0
    %958 = vmatprep.subr.mxu0 0.0
    %959 = vmatpush1.msra.mxu0 0.0
    %960 = vmatprep.subr.mxu0 0.0
    %961 = vmatpush1.msra.mxu0 0.0
    %962 = vmatprep.subr.mxu0 0.0
    %963 = vmatpush1.msra.mxu0 0.0
    %964 = vmatprep.subr.mxu0 0.0
    %965 = vmatpush1.msra.mxu0 0.0
    %966 = vmatprep.subr.mxu0 0.0
    %967 = vmatpush1.msra.mxu0 0.0
    %968 = vmatprep.subr.mxu0 0.0
    %969 = vmatpush1.msra.mxu0 0.0
    %970 = vmatprep.subr.mxu0 0.0
    %971 = vmatpush1.msra.mxu0 0.0
    %972 = vmatprep.subr.mxu0 0.0
    %973 = vmatpush1.msra.mxu0 0.0
    %974 = vmatprep.mubr.f32.mxu0 0.0
    %975 = vmatmul.mubr.f32.gmra.mrb[0].mxu0 %v905
    %v976 = vpop.f32.mrb[0].mxu0
    %v977 = vadd.f32 %v896, %v976
    %v978 = vpop.f32.mrb[0].mxu0
    %979 = vmatprep.mubr.f32.mxu0 0.0
    %980 = vmatmul.mubr.f32.gmra.mrb[0].mxu0 %v908
    %v981 = vpop.f32.mrb[0].mxu0
    %v982 = vadd.f32 %v901, %v981
    %v983 = vpop.f32.mrb[0].mxu0
    %984 = vdwg.mxu0
    %v985 = vld [vmem:[%s17] sm:$0x1]
    %v987 = vlaneseq
    %v988 = vshrl.u32 %v987, 7
    %v989 = vsub.s32 0, %v988
    %v990 = vrot.slane %v985, %v989
    %v992 = vadd.f32 %v977, %v990
    %v993 = vadd.f32 %v982, %v990
    %v994 = vmax.f32 %v992, 0.0
    %v995 = vmax.f32 %v993, 0.0
    %v996 = vld [vmem:[%s18] sm:$0xff]
    %v997 = vld [vmem:[%s18 + $0x8] sm:$0xff]
    %v998 = vld [vmem:[%s18 + $0x10] sm:$0xff]
    %v999 = vld [vmem:[%s18 + $0x18] sm:$0xff]
    %v1000 = vld [vmem:[%s19] sm:$0x1]
    %v1002 = vlaneseq
    %v1003 = vshrl.u32 %v1002, 7
    %v1004 = vsub.s32 0, %v1003
    %v1005 = vrot.slane %v1000, %v1004
    %v1008 = vsel %vm414, %v994, 0
    %v1011 = vsel %vm414, %v995, 0
    %1013 = vmatprep.subr.mxu0 0.0
    %1014 = vmatpush1.msra.mxu0 %v996
    %1015 = vmatprep.subr.mxu0 0.0
    %1016 = vmatpush1.msra.mxu0 %v997
    %1017 = vmatprep.subr.mxu0 0.0
    %1018 = vmatpush1.msra.mxu0 %v998
    %1019 = vmatprep.subr.mxu0 0.0
    %1020 = vmatpush1.msra.mxu0 %v999
    %1021 = vmatprep.subr.mxu0 0.0
    %1022 = vmatpush1.msra.mxu0 0.0
    %1023 = vmatprep.subr.mxu0 0.0
    %1024 = vmatpush1.msra.mxu0 0.0
    %1025 = vmatprep.subr.mxu0 0.0
    %1026 = vmatpush1.msra.mxu0 0.0
    %1027 = vmatprep.subr.mxu0 0.0
    %1028 = vmatpush1.msra.mxu0 0.0
    %1029 = vmatprep.subr.mxu0 0.0
    %1030 = vmatpush1.msra.mxu0 0.0
    %1031 = vmatprep.subr.mxu0 0.0
    %1032 = vmatpush1.msra.mxu0 0.0
    %1033 = vmatprep.subr.mxu0 0.0
    %1034 = vmatpush1.msra.mxu0 0.0
    %1035 = vmatprep.subr.mxu0 0.0
    %1036 = vmatpush1.msra.mxu0 0.0
    %1037 = vmatprep.subr.mxu0 0.0
    %1038 = vmatpush1.msra.mxu0 0.0
    %1039 = vmatprep.subr.mxu0 0.0
    %1040 = vmatpush1.msra.mxu0 0.0
    %1041 = vmatprep.subr.mxu0 0.0
    %1042 = vmatpush1.msra.mxu0 0.0
    %1043 = vmatprep.subr.mxu0 0.0
    %1044 = vmatpush1.msra.mxu0 0.0
    %1045 = vmatprep.subr.mxu0 0.0
    %1046 = vmatpush1.msra.mxu0 0.0
    %1047 = vmatprep.subr.mxu0 0.0
    %1048 = vmatpush1.msra.mxu0 0.0
    %1049 = vmatprep.subr.mxu0 0.0
    %1050 = vmatpush1.msra.mxu0 0.0
    %1051 = vmatprep.subr.mxu0 0.0
    %1052 = vmatpush1.msra.mxu0 0.0
    %1053 = vmatprep.subr.mxu0 0.0
    %1054 = vmatpush1.msra.mxu0 0.0
    %1055 = vmatprep.subr.mxu0 0.0
    %1056 = vmatpush1.msra.mxu0 0.0
    %1057 = vmatprep.subr.mxu0 0.0
    %1058 = vmatpush1.msra.mxu0 0.0
    %1059 = vmatprep.subr.mxu0 0.0
    %1060 = vmatpush1.msra.mxu0 0.0
    %1061 = vmatprep.subr.mxu0 0.0
    %1062 = vmatpush1.msra.mxu0 0.0
    %1063 = vmatprep.subr.mxu0 0.0
    %1064 = vmatpush1.msra.mxu0 0.0
    %1065 = vmatprep.subr.mxu0 0.0
    %1066 = vmatpush1.msra.mxu0 0.0
    %1067 = vmatprep.subr.mxu0 0.0
    %1068 = vmatpush1.msra.mxu0 0.0
    %1069 = vmatprep.subr.mxu0 0.0
    %1070 = vmatpush1.msra.mxu0 0.0
    %1071 = vmatprep.subr.mxu0 0.0
    %1072 = vmatpush1.msra.mxu0 0.0
    %1073 = vmatprep.subr.mxu0 0.0
    %1074 = vmatpush1.msra.mxu0 0.0
    %1075 = vmatprep.subr.mxu0 0.0
    %1076 = vmatpush1.msra.mxu0 0.0
    %1077 = vmatprep.mubr.f32.mxu0 0.0
    %1078 = vmatmul.mubr.f32.gmra.mrb[0].mxu0 %v1008
    %v1079 = vpop.f32.mrb[0].mxu0
    %v1080 = vadd.f32 %v1005, %v1079
    %v1081 = vpop.f32.mrb[0].mxu0
    %1082 = vmatprep.mubr.f32.mxu0 0.0
    %1083 = vmatmul.mubr.f32.gmra.mrb[0].mxu0 %v1011
    %v1084 = vpop.f32.mrb[0].mxu0
    %v1085 = vadd.f32 %v1005, %v1084
    %v1086 = vpop.f32.mrb[0].mxu0
    %1087 = vdwg.mxu0
    %v1088 = vmax.f32 %v1080, 0.0
    %v1089 = vmax.f32 %v1085, 0.0
    %v1090 = vld [vmem:[%s20] sm:$0xff]
    %v1091 = vld [vmem:[%s20 + $0x8] sm:$0xff]
    %v1092 = vld [vmem:[%s20 + $0x10] sm:$0xff]
    %v1093 = vld [vmem:[%s20 + $0x18] sm:$0xff]
    %v1094 = vld [vmem:[%s21] sm:$0x1]
    %v1096 = vlaneseq
    %v1097 = vshrl.u32 %v1096, 7
    %v1098 = vsub.s32 0, %v1097
    %v1099 = vrot.slane %v1094, %v1098
    %v1102 = vsel %vm414, %v1088, 0
    %v1105 = vsel %vm414, %v1089, 0
    %1107 = vmatprep.subr.mxu0 0.0
    %1108 = vmatpush1.msra.mxu0 %v1090
    %1109 = vmatprep.subr.mxu0 0.0
    %1110 = vmatpush1.msra.mxu0 %v1091
    %1111 = vmatprep.subr.mxu0 0.0
    %1112 = vmatpush1.msra.mxu0 %v1092
    %1113 = vmatprep.subr.mxu0 0.0
    %1114 = vmatpush1.msra.mxu0 %v1093
    %1115 = vmatprep.subr.mxu0 0.0
    %1116 = vmatpush1.msra.mxu0 0.0
    %1117 = vmatprep.subr.mxu0 0.0
    %1118 = vmatpush1.msra.mxu0 0.0
    %1119 = vmatprep.subr.mxu0 0.0
    %1120 = vmatpush1.msra.mxu0 0.0
    %1121 = vmatprep.subr.mxu0 0.0
    %1122 = vmatpush1.msra.mxu0 0.0
    %1123 = vmatprep.subr.mxu0 0.0
    %1124 = vmatpush1.msra.mxu0 0.0
    %1125 = vmatprep.subr.mxu0 0.0
    %1126 = vmatpush1.msra.mxu0 0.0
    %1127 = vmatprep.subr.mxu0 0.0
    %1128 = vmatpush1.msra.mxu0 0.0
    %1129 = vmatprep.subr.mxu0 0.0
    %1130 = vmatpush1.msra.mxu0 0.0
    %1131 = vmatprep.subr.mxu0 0.0
    %1132 = vmatpush1.msra.mxu0 0.0
    %1133 = vmatprep.subr.mxu0 0.0
    %1134 = vmatpush1.msra.mxu0 0.0
    %1135 = vmatprep.subr.mxu0 0.0
    %1136 = vmatpush1.msra.mxu0 0.0
    %1137 = vmatprep.subr.mxu0 0.0
    %1138 = vmatpush1.msra.mxu0 0.0
    %1139 = vmatprep.subr.mxu0 0.0
    %1140 = vmatpush1.msra.mxu0 0.0
    %1141 = vmatprep.subr.mxu0 0.0
    %1142 = vmatpush1.msra.mxu0 0.0
    %1143 = vmatprep.subr.mxu0 0.0
    %1144 = vmatpush1.msra.mxu0 0.0
    %1145 = vmatprep.subr.mxu0 0.0
    %1146 = vmatpush1.msra.mxu0 0.0
    %1147 = vmatprep.subr.mxu0 0.0
    %1148 = vmatpush1.msra.mxu0 0.0
    %1149 = vmatprep.subr.mxu0 0.0
    %1150 = vmatpush1.msra.mxu0 0.0
    %1151 = vmatprep.subr.mxu0 0.0
    %1152 = vmatpush1.msra.mxu0 0.0
    %1153 = vmatprep.subr.mxu0 0.0
    %1154 = vmatpush1.msra.mxu0 0.0
    %1155 = vmatprep.subr.mxu0 0.0
    %1156 = vmatpush1.msra.mxu0 0.0
    %1157 = vmatprep.subr.mxu0 0.0
    %1158 = vmatpush1.msra.mxu0 0.0
    %1159 = vmatprep.subr.mxu0 0.0
    %1160 = vmatpush1.msra.mxu0 0.0
    %1161 = vmatprep.subr.mxu0 0.0
    %1162 = vmatpush1.msra.mxu0 0.0
    %1163 = vmatprep.subr.mxu0 0.0
    %1164 = vmatpush1.msra.mxu0 0.0
    %1165 = vmatprep.subr.mxu0 0.0
    %1166 = vmatpush1.msra.mxu0 0.0
    %1167 = vmatprep.subr.mxu0 0.0
    %1168 = vmatpush1.msra.mxu0 0.0
    %1169 = vmatprep.subr.mxu0 0.0
    %1170 = vmatpush1.msra.mxu0 0.0
    %1171 = vmatprep.mubr.f32.mxu0 0.0
    %1172 = vmatmul.mubr.f32.gmra.mrb[0].mxu0 %v1102
    %v1173 = vpop.f32.mrb[0].mxu0
    %v1174 = vadd.f32 %v1099, %v1173
    %v1175 = vpop.f32.mrb[0].mxu0
    %1176 = vmatprep.mubr.f32.mxu0 0.0
    %1177 = vmatmul.mubr.f32.gmra.mrb[0].mxu0 %v1105
    %v1178 = vpop.f32.mrb[0].mxu0
    %v1179 = vadd.f32 %v1099, %v1178
    %v1180 = vpop.f32.mrb[0].mxu0
    %1181 = vdwg.mxu0
    %v1182 = vmax.f32 %v1174, -20.0
    %v1183 = vmax.f32 %v1179, -20.0
    %v1184 = vmin.f32 %v1182, 2.0
    %v1185 = vmin.f32 %v1183, 2.0
    %v1186 = vmul.f32 %v1184, 1.442695
    %v1187 = vpow.pop %v1186
    %v1188 = vmul.f32 %v1185, 1.442695
    %v1189 = vpow.pop %v1188
    %v1190 = vld [vmem:[%s3] sm:$0xff]
    %v1191 = vld [vmem:[%s3 + $0x8] sm:$0xff]
    %1194 = vrot.lane.b32.xlu0 %v1190, 4
    %v1195 = vpop.permute.xlu0 %1194
    %1196 = vrot.lane.b32.xlu0 %v1191, 4
    %v1197 = vpop.permute.xlu0 %1196
    %v1200 = vmul.f32 %v1187, %v1195
    %v1201 = vmul.f32 %v1189, %v1197
    %1204 = vrot.lane.b32.xlu0 %v1200, 124
    %v1205 = vpop.permute.xlu0 %1204
    %1206 = vrot.lane.b32.xlu0 %v1201, 124
    %v1207 = vpop.permute.xlu0 %1206
    %v1210 = vadd.f32 %v1174, %v1205
    %v1211 = vadd.f32 %v1179, %v1207
    %v1212 = vtanh.pop %v1210
    %v1213 = vtanh.pop %v1211
    %v1214 = vmul.f32 %v1190, -0.5
    %v1215 = vmul.f32 %v1191, -0.5
    %v1216 = vmul.f32 %v1214, %v1190
    %v1217 = vmul.f32 %v1215, %v1191
    %1220 = vrot.lane.b32.xlu0 %v1184, 124
    %v1221 = vpop.permute.xlu0 %1220
    %1222 = vrot.lane.b32.xlu0 %v1185, 124
    %v1223 = vpop.permute.xlu0 %1222
    %v1226 = vsub.f32 %v1216, %v1221
    %v1227 = vsub.f32 %v1217, %v1223
    %v1228 = vsub.f32 %v1226, 0.9189385
    %v1229 = vsub.f32 %v1227, 0.9189385
    %v1230 = vmul.f32 %v1212, %v1212
    %v1231 = vmul.f32 %v1213, %v1213
    %v1232 = vsub.f32 1.0, %v1230
    %v1233 = vsub.f32 1.0, %v1231
    %v1234 = vadd.f32 %v1232, 1e-06
    %v1235 = vadd.f32 %v1233, 1e-06
    %v1236 = vlog2.pop %v1234
    %v1237 = vmul.f32 %v1236, 0.6931472
    %v1238 = vlog2.pop %v1235
    %v1239 = vmul.f32 %v1238, 0.6931472
    %v1240 = vsub.f32 %v1228, %v1237
    %v1241 = vsub.f32 %v1229, %v1239
    %v1242 = vsel %vm615, %v1240, 0.0
    %1243 = vadd.xlane.f32.xlu0 %v1242
    %v1244 = vpop.xlane.xlu0 %1243
    %v1245 = vsel %vm615, %v1241, 0.0
    %1246 = vadd.xlane.f32.xlu0 %v1245
    %v1247 = vpop.xlane.xlu0 %1246
    %1248 = vst.msk [vmem:[#allocation5] sm:$0xff] %vm615, %v635
    %1249 = vst.msk [vmem:[#allocation5 + $0x8] sm:$0xff] %vm615, %v637
    %1250 = vrot.lane.b32.xlu0 %v811, 4
    %v1251 = vpop.permute.xlu0 %1250
    %1252 = vrot.lane.b32.xlu0 %v816, 4
    %v1253 = vpop.permute.xlu0 %1252
    %vm1256 = vcmask 97312
    %1257 = vst.msk [vmem:[#allocation5] sm:$0xff] %vm1256, %v1251
    %1258 = vst.msk [vmem:[#allocation5 + $0x8] sm:$0xff] %vm1256, %v1253
    %1261 = vrot.lane.b32.xlu0 %v1212, 12
    %v1262 = vpop.permute.xlu0 %1261
    %1263 = vrot.lane.b32.xlu0 %v1213, 12
    %v1264 = vpop.permute.xlu0 %1263
    %vm1267 = vcmask 130144
    %1268 = vst.msk [vmem:[#allocation5] sm:$0xff] %vm1267, %v1262
    %1269 = vst.msk [vmem:[#allocation5 + $0x8] sm:$0xff] %vm1267, %v1264
    %1272 = vrot.lane.b32.xlu0 %v1174, 16
    %v1273 = vpop.permute.xlu0 %1272
    %1274 = vrot.lane.b32.xlu0 %v1179, 16
    %v1275 = vpop.permute.xlu0 %1274
    %vm1278 = vcmask 162944
    %1279 = vst.msk [vmem:[#allocation5] sm:$0xff] %vm1278, %v1273
    %1280 = vst.msk [vmem:[#allocation5 + $0x8] sm:$0xff] %vm1278, %v1275
    %1281 = vrot.lane.b32.xlu0 %v1184, 16
    %v1282 = vpop.permute.xlu0 %1281
    %1283 = vrot.lane.b32.xlu0 %v1185, 16
    %v1284 = vpop.permute.xlu0 %1283
    %vm1287 = vcmask 195744
    %1288 = vst.msk [vmem:[#allocation5] sm:$0xff] %vm1287, %v1282
    %1289 = vst.msk [vmem:[#allocation5 + $0x8] sm:$0xff] %vm1287, %v1284
    %1292 = vrot.lane.b32.xlu0 %v1210, 24
    %v1293 = vpop.permute.xlu0 %1292
    %1294 = vrot.lane.b32.xlu0 %v1211, 24
    %v1295 = vpop.permute.xlu0 %1294
    %vm1298 = vcmask 228544
    %1299 = vst.msk [vmem:[#allocation5] sm:$0xff] %vm1298, %v1293
    %1300 = vst.msk [vmem:[#allocation5 + $0x8] sm:$0xff] %vm1298, %v1295
    %vm1301 = vcmask 236768
    %1302 = vst.msk [vmem:[#allocation5] sm:$0xff] %vm1301, %v1244
    %1303 = vst.msk [vmem:[#allocation5 + $0x8] sm:$0xff] %vm1301, %v1247
    // Predicated region
    $region90: #{tpu_custom_call.1} parent=1 // pred_check
      _
    $region91: #{tpu_custom_call.1} parent=1 // pred_check_branch
      %1305 = sbr.rel (0) target = $region93
    $region92: #{tpu_custom_call.1} parent=1 // pred_region
      %s1307 = ssub.s32 32, 32
      %1308 = vsyncadd [#allocation4], %s1307
      %s1310 = sshll.u32 [#allocation3], 4
      %s1311 = int_to_ptr.vmem [resolvable:$true] %s1310
      %1313 = dma.vmem_to_hbm [thread:$0]  %s1311, 32, %s22, [#allocation4]
    $region93: #{tpu_custom_call.1} parent=1 // pred_fallthru
      _
    // Predicated region
    $region94: #{tpu_custom_call.1} parent=1 // pred_check
      _
    $region95: #{tpu_custom_call.1} parent=1 // pred_check_branch
      %1315 = sbr.rel (0) target = $region97
    $region96: #{tpu_custom_call.1} parent=1 // pred_region
      %s1317 = ssub.s32 256, 256
      %1318 = vsyncadd [#allocation6], %s1317
      %s1319 = sshll.u32 [#allocation5], 4
      %s1320 = int_to_ptr.vmem [resolvable:$true] %s1319
      %1325 = dma.vmem_to_hbm [thread:$0]  %s1320, 256, %s23, [#allocation6], 128, 128, 8
    $region97: #{tpu_custom_call.1} parent=1 // pred_fallthru
      _
    // Predicated region
    $region98: #{tpu_custom_call.1} parent=1 // pred_check
      _
    $region99: #{tpu_custom_call.1} parent=1 // pred_check_branch
      %1327 = sbr.rel (0) target = $region101
    $region100: #{tpu_custom_call.1} parent=1 // pred_region
      %1328 = dma.done [#allocation4], 32
    $region101: #{tpu_custom_call.1} parent=1 // pred_fallthru
      _
    // Predicated region
    $region102: #{tpu_custom_call.1} parent=1 // pred_check
      _
    $region103: #{tpu_custom_call.1} parent=1 // pred_check_branch
      %1330 = sbr.rel (0) target = $region105
    $region104: #{tpu_custom_call.1} parent=1 // pred_region
      %1331 = dma.done [#allocation6], 256
    $region105: #{tpu_custom_call.1} parent=1 // pred_fallthru
      _
    %1332 = vsyncpa [#allocation4], 1
    %1333 = vsyncpa [#allocation6], 1

</llo_original>
